<compile_context>
chip_gen: v7x
topology: tpu7x:2x2x1
jax: 0.10.0
libtpu: 0.0.40
codegen_flags: <defaults>
</compile_context>

<pallas_src>
import functools

import numpy as np

import jax
import jax.numpy as jnp
from jax.experimental import pallas as pl
from jax.experimental.pallas import tpu as pltpu


# ------------------------------- fused kernel --------------------------------

def _cifar10net_kernel(p1_ref, w1_ref, b1_ref, g_ref, w2_ref, b2_ref,
                       v1_ref, bf1_ref, wf2_ref, bf2_ref, o_ref, fc_ref):
    """One image per grid step.

    Example shapes (16x16 input):
      p1_ref : (P1, K1p)    = (64, 32)    conv1 im2col patches, bf16 (K zero-padded)
      w1_ref : (K1p, C1)    = (32, 32)    bf16
      b1_ref : (1, C1)                    f32
      g_ref  : (9, P2, P1)  = (9, 16, 64) 0/1 tap-selection matrices, bf16
      w2_ref : (9, C1, C2)  = (9, 32, 64) bf16
      b2_ref : (1, C2)                    f32
      v1_ref : (P2*C2, NH)  = (1024, 64)  fc1 weight, rows in (position, channel) order, bf16
      bf1_ref: (1, NH)   wf2_ref: (1, NH)   bf2_ref: (1, 1)   f32
      o_ref  : (1, 1)                     f32
      fc_ref : (1, P2*C2)  VMEM scratch   f32
    """
    p2 = g_ref.shape[1]
    c2 = w2_ref.shape[2]

    # ---- conv1 + relu: one MXU matmul ---------------------------------------
    h1 = jnp.dot(p1_ref[...], w1_ref[...], preferred_element_type=jnp.float32)
    h1 = jnp.maximum(h1 + b1_ref[...], 0.0)                      # (P1, C1) f32
    h1b = h1.astype(jnp.bfloat16)

    # ---- conv2 + relu: 9 batch-independent 0/1 tap selections + weight matmuls
    acc = jnp.zeros((p2, c2), dtype=jnp.float32)
    for t in range(9):                                           # static unroll
        tap = jnp.dot(g_ref[t], h1b, preferred_element_type=jnp.float32)
        acc = acc + jnp.dot(tap.astype(jnp.bfloat16), w2_ref[t],
                            preferred_element_type=jnp.float32)
    h2 = jnp.maximum(acc + b2_ref[...], 0.0)                     # (P2, C2) f32

    # ---- flatten (P2, C2) -> (1, P2*C2) via static lane-slice stores --------
    # (avoids an in-kernel lane-merge reshape; row order p*C2 + c matches v1)
    for p in range(p2):                                          # static unroll
        fc_ref[:, p * c2:(p + 1) * c2] = h2[p:p + 1, :]

    # ---- fc1 + relu: ONE (1, P2*C2) @ (P2*C2, NH) matmul ---------------------
    y = jnp.dot(fc_ref[...].astype(jnp.bfloat16), v1_ref[...],
                preferred_element_type=jnp.float32)
    y = jnp.maximum(y + bf1_ref[...], 0.0)                       # (1, NH) f32

    # ---- fc2 (NH -> 1): VPU multiply + lane reduction ------------------------
    out = jnp.sum(y * wf2_ref[...], axis=-1, keepdims=True) + bf2_ref[...]
    o_ref[...] = out.astype(o_ref.dtype)


# ------------------------------ trace-time glue ------------------------------

def _conv_out_hw(h, w):
    # k=3, stride=2, pad=1
    return (h + 2 - 3) // 2 + 1, (w + 2 - 3) // 2 + 1


@functools.lru_cache(maxsize=None)
def _tap_selection_matrices(h1, w1, h2, w2):
    """Batch-independent G[t, io*w2+jo, hi*w1+wj] = 1 with
    (hi, wj) = (2*io + kh - 1, 2*jo + kw - 1); rows whose tap falls in the zero
    padding stay all-zero (== zero-padded conv)."""
    p1, p2 = h1 * w1, h2 * w2
    g = np.zeros((9, p2, p1), dtype=np.float32)
    for kh in range(3):
        for kw in range(3):
            t = kh * 3 + kw
            for io in range(h2):
                for jo in range(w2):
                    hi, wj = 2 * io + kh - 1, 2 * jo + kw - 1
                    if 0 <= hi < h1 and 0 <= wj < w1:
                        g[t, io * w2 + jo, hi * w1 + wj] = 1.0
    return g


def _im2col_conv1(x_nchw, k_pad):
    """3x3/stride-2/pad-1 im2col of the raw input (tiny XLA glue, per call).
    Returns (N, Ho*Wo, k_pad) bf16 patches with feature order (kh, kw, cin)."""
    n, c, h, w = x_nchw.shape
    ho, wo = _conv_out_hw(h, w)
    x = jnp.transpose(x_nchw, (0, 2, 3, 1))                      # NHWC
    x = jnp.pad(x, ((0, 0), (1, 1), (1, 1), (0, 0)))
    taps = [x[:, kh:kh + 2 * ho:2, kw:kw + 2 * wo:2, :]
            for kh in range(3) for kw in range(3)]
    p = jnp.stack(taps, axis=3).reshape(n, ho * wo, 9 * c)
    if k_pad > 9 * c:
        p = jnp.pad(p, ((0, 0), (0, 0), (0, k_pad - 9 * c)))
    return p.astype(jnp.bfloat16), ho, wo


def prepare_params(params):
    """Hoist ALL weight layout / dtype work out of the forward path (runs once)."""
    c1, cin = params["conv1_w"].shape[0], params["conv1_w"].shape[1]
    c2 = params["conv2_w"].shape[0]
    nh = params["fc1_w"].shape[0]                                # fc1 hidden width (64)
    k1 = 9 * cin
    k1p = -(-k1 // 8) * 8                                        # 27 -> 32
    p2 = params["fc1_w"].shape[1] // c2                          # spatial positions after conv2

    w1 = jnp.transpose(params["conv1_w"], (2, 3, 1, 0)).reshape(k1, c1)
    w1 = jnp.pad(w1, ((0, k1p - k1), (0, 0)))
    w2 = jnp.transpose(params["conv2_w"], (2, 3, 1, 0)).reshape(9, c1, c2)
    # torch flatten index is c*P2 + p; regroup fc1_w rows to (p, c) order so the
    # kernel's (position, channel) flatten feeds it directly.
    v1 = jnp.transpose(params["fc1_w"].reshape(nh, c2, p2), (2, 1, 0)).reshape(p2 * c2, nh)

    f32, bf16 = jnp.float32, jnp.bfloat16
    return {
        "w1": w1.astype(bf16), "b1": params["conv1_b"].reshape(1, c1).astype(f32),
        "w2": w2.astype(bf16), "b2": params["conv2_b"].reshape(1, c2).astype(f32),
        "v1": v1.astype(bf16), "bf1": params["fc1_b"].reshape(1, nh).astype(f32),
        "wf2": params["fc2_w"].reshape(1, nh).astype(f32),
        "bf2": params["fc2_b"].reshape(1, 1).astype(f32),
    }


def cifar10net_forward(prepared, x):
    """Forward matching CIFAR10Net.  Accepts NCHW or [..., C, H, W] 5-D input."""
    x_shape = x.shape
    if x.ndim == 5:
        x = x.reshape((-1,) + x_shape[-3:])
    n = x.shape[0]

    k1p, c1 = prepared["w1"].shape
    c2 = prepared["w2"].shape[2]
    nh = prepared["v1"].shape[1]

    patches, h1o, w1o = _im2col_conv1(x, k1p)                    # (N, P1, K1p) bf16
    h2o, w2o = _conv_out_hw(h1o, w1o)
    p1, p2 = h1o * w1o, h2o * w2o
    assert prepared["v1"].shape[0] == p2 * c2, "num_fc_first inconsistent with input size"

    g = jnp.asarray(_tap_selection_matrices(h1o, w1o, h2o, w2o), dtype=jnp.bfloat16)

    operands = (patches, prepared["w1"], prepared["b1"], g, prepared["w2"],
                prepared["b2"], prepared["v1"], prepared["bf1"],
                prepared["wf2"], prepared["bf2"])
    flops = 2 * n * (p1 * k1p * c1 + 9 * (p2 * p1 * c1 + p2 * c1 * c2)
                     + p2 * c2 * nh + nh)
    bytes_accessed = sum(int(np.prod(a.shape)) * a.dtype.itemsize
                         for a in operands) + n * 4

    out = pl.pallas_call(
        _cifar10net_kernel,
        out_shape=jax.ShapeDtypeStruct((n, 1, 1), jnp.float32),
        grid=(n,),
        in_specs=[
            pl.BlockSpec((None, p1, k1p), lambda i: (i, 0, 0)),   # patches: per image
            pl.BlockSpec((k1p, c1), lambda i: (0, 0)),            # w1: resident
            pl.BlockSpec((1, c1), lambda i: (0, 0)),              # b1
            pl.BlockSpec((9, p2, p1), lambda i: (0, 0, 0)),       # G (batch-independent)
            pl.BlockSpec((9, c1, c2), lambda i: (0, 0, 0)),       # w2
            pl.BlockSpec((1, c2), lambda i: (0, 0)),              # b2
            pl.BlockSpec((p2 * c2, nh), lambda i: (0, 0)),        # v1 (fc1, flattened)
            pl.BlockSpec((1, nh), lambda i: (0, 0)),              # bf1
            pl.BlockSpec((1, nh), lambda i: (0, 0)),              # wf2
            pl.BlockSpec((1, 1), lambda i: (0, 0)),               # bf2
        ],
        out_specs=pl.BlockSpec((None, 1, 1), lambda i: (i, 0, 0)),
        scratch_shapes=[pltpu.VMEM((1, p2 * c2), jnp.float32)],
        compiler_params=pltpu.CompilerParams(
            dimension_semantics=("parallel",),
            vmem_limit_bytes=32 * 1024 * 1024),
        cost_estimate=pl.CostEstimate(
            flops=flops, transcendentals=0, bytes_accessed=bytes_accessed),
    )(*operands)
    return out.reshape(x_shape[:-3] + (1,))


# --------------------------- params / reference ------------------------------

def init_params(key, num_fc_first):
    ks = jax.random.split(key, 8)

    def nrm(k, shape, scale):
        return scale * jax.random.normal(k, shape, dtype=jnp.float32)

    return {
        "conv1_w": nrm(ks[0], (32, 3, 3, 3), 0.10),
        "conv1_b": nrm(ks[1], (32,), 0.10),
        "conv2_w": nrm(ks[2], (64, 32, 3, 3), 0.05),
        "conv2_b": nrm(ks[3], (64,), 0.05),
        "fc1_w":   nrm(ks[4], (64, num_fc_first), 0.02),
        "fc1_b":   nrm(ks[5], (64,), 0.02),
        "fc2_w":   nrm(ks[6], (1, 64), 0.05),
        "fc2_b":   nrm(ks[7], (1,), 0.05),
    }


def reference_forward(params, x):
    """Pure-JAX f32 reference mirroring the PyTorch forward (for validation)."""
    x_shape = x.shape
    if x.ndim == 5:
        x = x.reshape((-1,) + x_shape[-3:])

    def conv(x, w, b):
        y = jax.lax.conv_general_dilated(
            x, w, window_strides=(2, 2), padding=((1, 1), (1, 1)),
            dimension_numbers=("NCHW", "OIHW", "NCHW"))
        return jax.nn.relu(y + b[None, :, None, None])

    h = conv(x, params["conv1_w"], params["conv1_b"])
    h = conv(h, params["conv2_w"], params["conv2_b"])
    f = params["fc1_w"].shape[1]
    h = h.reshape(x_shape[:-3] + (f,))
    h = jax.nn.relu(h @ params["fc1_w"].T + params["fc1_b"])
    return h @ params["fc2_w"].T + params["fc2_b"]


# ----------------------------------- main ------------------------------------

if __name__ == "__main__":
    key = jax.random.PRNGKey(0)
    kx, kp = jax.random.split(key)

    # Small CIFAR-like input: N=2, C=3, H=W=16 -> conv1: 8x8, conv2: 4x4
    H = W = 16
    num_fc_first = 64 * (H // 4) * (W // 4)   # 1024
    x = jax.random.normal(kx, (2, 3, H, W), dtype=jnp.float32)
    params = init_params(kp, num_fc_first)

    prepared = prepare_params(params)          # one-time weight layout / dtype work
    fwd = jax.jit(cifar10net_forward)

    out = jax.block_until_ready(fwd(prepared, x))

    ref = reference_forward(params, x)
    assert out.shape == (2, 1), out.shape
    # bf16 MXU operands with f32 accumulation -> loose tolerance vs f32 reference.
    assert jnp.allclose(out, ref, rtol=2e-2, atol=2e-2), \
        float(jnp.max(jnp.abs(out - ref)))
    print("KERNEL_OK")
</pallas_src>

<mosaic_0001>
module attributes {stable_mosaic.version = 11 : i64} {
  func.func @_cifar10net_kernel(%arg0: i32, %arg1: memref<1x64x32xbf16, #tpu.memory_space<vmem>>, %arg2: memref<32x32xbf16, #tpu.memory_space<vmem>>, %arg3: memref<1x32xf32, #tpu.memory_space<vmem>>, %arg4: memref<9x16x64xbf16, #tpu.memory_space<vmem>>, %arg5: memref<9x32x64xbf16, #tpu.memory_space<vmem>>, %arg6: memref<1x64xf32, #tpu.memory_space<vmem>>, %arg7: memref<1024x64xbf16, #tpu.memory_space<vmem>>, %arg8: memref<1x64xf32, #tpu.memory_space<vmem>>, %arg9: memref<1x64xf32, #tpu.memory_space<vmem>>, %arg10: memref<1x1xf32, #tpu.memory_space<vmem>>, %arg11: memref<1x1x1xf32, #tpu.memory_space<vmem>>, %arg12: memref<1x1024xf32, #tpu.memory_space<vmem>>) attributes {dimension_semantics = [#tpu.dimension_semantics<parallel>], iteration_bounds = array<i64: 2>, scalar_prefetch = 0 : i64, scratch_operands = 1 : i64, tpu.core_type = #tpu.core_type<tc>, window_params = [{transform_indices = @transform_0, window_bounds = array<i64: 1, 64, 32>}, {pipeline_mode = #tpu.pipeline_mode<synchronous>, transform_indices = @transform_1, window_bounds = array<i64: 32, 32>}, {pipeline_mode = #tpu.pipeline_mode<synchronous>, transform_indices = @transform_2, window_bounds = array<i64: 1, 32>}, {pipeline_mode = #tpu.pipeline_mode<synchronous>, transform_indices = @transform_3, window_bounds = array<i64: 9, 16, 64>}, {pipeline_mode = #tpu.pipeline_mode<synchronous>, transform_indices = @transform_4, window_bounds = array<i64: 9, 32, 64>}, {pipeline_mode = #tpu.pipeline_mode<synchronous>, transform_indices = @transform_5, window_bounds = array<i64: 1, 64>}, {pipeline_mode = #tpu.pipeline_mode<synchronous>, transform_indices = @transform_6, window_bounds = array<i64: 1024, 64>}, {pipeline_mode = #tpu.pipeline_mode<synchronous>, transform_indices = @transform_7, window_bounds = array<i64: 1, 64>}, {pipeline_mode = #tpu.pipeline_mode<synchronous>, transform_indices = @transform_8, window_bounds = array<i64: 1, 64>}, {pipeline_mode = #tpu.pipeline_mode<synchronous>, transform_indices = @transform_9, window_bounds = array<i64: 1, 1>}, {transform_indices = @transform_10, window_bounds = array<i64: 1, 1, 1>}]} {
    %c0 = arith.constant 0 : index
    %c0_0 = arith.constant 0 : index
    %c0_1 = arith.constant 0 : index
    %0 = vector.load %arg1[%c0, %c0_0, %c0_1] : memref<1x64x32xbf16, #tpu.memory_space<vmem>>, vector<1x64x32xbf16>
    %1 = vector.shape_cast %0 : vector<1x64x32xbf16> to vector<64x32xbf16>
    %c0_2 = arith.constant 0 : index
    %c0_3 = arith.constant 0 : index
    %2 = vector.load %arg2[%c0_2, %c0_3] : memref<32x32xbf16, #tpu.memory_space<vmem>>, vector<32x32xbf16>
    %cst = arith.constant dense<0.000000e+00> : vector<64x32xf32>
    %3 = tpu.matmul %1, %2, %cst {dimension_numbers = #tpu.dot_dimension_numbers<[1], [0], [0], [1], [0, 0, 1, 1], [], []>} : vector<64x32xbf16>, vector<32x32xbf16>, vector<64x32xf32> -> vector<64x32xf32>
    %c0_4 = arith.constant 0 : index
    %c0_5 = arith.constant 0 : index
    %4 = vector.load %arg3[%c0_4, %c0_5] : memref<1x32xf32, #tpu.memory_space<vmem>>, vector<1x32xf32>
    %5 = vector.broadcast %4 : vector<1x32xf32> to vector<64x32xf32>
    %6 = arith.addf %3, %5 : vector<64x32xf32>
    %cst_6 = arith.constant 0.000000e+00 : f32
    %7 = vector.broadcast %cst_6 : f32 to vector<64x32xf32>
    %8 = arith.maximumf %6, %7 : vector<64x32xf32>
    %9 = arith.truncf %8 : vector<64x32xf32> to vector<64x32xbf16>
    %cst_7 = arith.constant 0.000000e+00 : f32
    %10 = vector.broadcast %cst_7 : f32 to vector<16x64xf32>
    %c0_8 = arith.constant 0 : index
    %c0_9 = arith.constant 0 : index
    %c0_10 = arith.constant 0 : index
    %11 = vector.load %arg4[%c0_8, %c0_9, %c0_10] : memref<9x16x64xbf16, #tpu.memory_space<vmem>>, vector<1x16x64xbf16>
    %12 = vector.shape_cast %11 : vector<1x16x64xbf16> to vector<16x64xbf16>
    %cst_11 = arith.constant dense<0.000000e+00> : vector<16x32xf32>
    %13 = tpu.matmul %12, %9, %cst_11 {dimension_numbers = #tpu.dot_dimension_numbers<[1], [0], [0], [1], [0, 0, 1, 1], [], []>} : vector<16x64xbf16>, vector<64x32xbf16>, vector<16x32xf32> -> vector<16x32xf32>
    %14 = arith.truncf %13 : vector<16x32xf32> to vector<16x32xbf16>
    %c0_12 = arith.constant 0 : index
    %c0_13 = arith.constant 0 : index
    %c0_14 = arith.constant 0 : index
    %15 = vector.load %arg5[%c0_12, %c0_13, %c0_14] : memref<9x32x64xbf16, #tpu.memory_space<vmem>>, vector<1x32x64xbf16>
    %16 = vector.shape_cast %15 : vector<1x32x64xbf16> to vector<32x64xbf16>
    %cst_15 = arith.constant dense<0.000000e+00> : vector<16x64xf32>
    %17 = tpu.matmul %14, %16, %cst_15 {dimension_numbers = #tpu.dot_dimension_numbers<[1], [0], [0], [1], [0, 0, 1, 1], [], []>} : vector<16x32xbf16>, vector<32x64xbf16>, vector<16x64xf32> -> vector<16x64xf32>
    %18 = arith.addf %10, %17 : vector<16x64xf32>
    %c1 = arith.constant 1 : index
    %c0_16 = arith.constant 0 : index
    %c0_17 = arith.constant 0 : index
    %19 = vector.load %arg4[%c1, %c0_16, %c0_17] : memref<9x16x64xbf16, #tpu.memory_space<vmem>>, vector<1x16x64xbf16>
    %20 = vector.shape_cast %19 : vector<1x16x64xbf16> to vector<16x64xbf16>
    %cst_18 = arith.constant dense<0.000000e+00> : vector<16x32xf32>
    %21 = tpu.matmul %20, %9, %cst_18 {dimension_numbers = #tpu.dot_dimension_numbers<[1], [0], [0], [1], [0, 0, 1, 1], [], []>} : vector<16x64xbf16>, vector<64x32xbf16>, vector<16x32xf32> -> vector<16x32xf32>
    %22 = arith.truncf %21 : vector<16x32xf32> to vector<16x32xbf16>
    %c1_19 = arith.constant 1 : index
    %c0_20 = arith.constant 0 : index
    %c0_21 = arith.constant 0 : index
    %23 = vector.load %arg5[%c1_19, %c0_20, %c0_21] : memref<9x32x64xbf16, #tpu.memory_space<vmem>>, vector<1x32x64xbf16>
    %24 = vector.shape_cast %23 : vector<1x32x64xbf16> to vector<32x64xbf16>
    %cst_22 = arith.constant dense<0.000000e+00> : vector<16x64xf32>
    %25 = tpu.matmul %22, %24, %cst_22 {dimension_numbers = #tpu.dot_dimension_numbers<[1], [0], [0], [1], [0, 0, 1, 1], [], []>} : vector<16x32xbf16>, vector<32x64xbf16>, vector<16x64xf32> -> vector<16x64xf32>
    %26 = arith.addf %18, %25 : vector<16x64xf32>
    %c2 = arith.constant 2 : index
    %c0_23 = arith.constant 0 : index
    %c0_24 = arith.constant 0 : index
    %27 = vector.load %arg4[%c2, %c0_23, %c0_24] : memref<9x16x64xbf16, #tpu.memory_space<vmem>>, vector<1x16x64xbf16>
    %28 = vector.shape_cast %27 : vector<1x16x64xbf16> to vector<16x64xbf16>
    %cst_25 = arith.constant dense<0.000000e+00> : vector<16x32xf32>
    %29 = tpu.matmul %28, %9, %cst_25 {dimension_numbers = #tpu.dot_dimension_numbers<[1], [0], [0], [1], [0, 0, 1, 1], [], []>} : vector<16x64xbf16>, vector<64x32xbf16>, vector<16x32xf32> -> vector<16x32xf32>
    %30 = arith.truncf %29 : vector<16x32xf32> to vector<16x32xbf16>
    %c2_26 = arith.constant 2 : index
    %c0_27 = arith.constant 0 : index
    %c0_28 = arith.constant 0 : index
    %31 = vector.load %arg5[%c2_26, %c0_27, %c0_28] : memref<9x32x64xbf16, #tpu.memory_space<vmem>>, vector<1x32x64xbf16>
    %32 = vector.shape_cast %31 : vector<1x32x64xbf16> to vector<32x64xbf16>
    %cst_29 = arith.constant dense<0.000000e+00> : vector<16x64xf32>
    %33 = tpu.matmul %30, %32, %cst_29 {dimension_numbers = #tpu.dot_dimension_numbers<[1], [0], [0], [1], [0, 0, 1, 1], [], []>} : vector<16x32xbf16>, vector<32x64xbf16>, vector<16x64xf32> -> vector<16x64xf32>
    %34 = arith.addf %26, %33 : vector<16x64xf32>
    %c3 = arith.constant 3 : index
    %c0_30 = arith.constant 0 : index
    %c0_31 = arith.constant 0 : index
    %35 = vector.load %arg4[%c3, %c0_30, %c0_31] : memref<9x16x64xbf16, #tpu.memory_space<vmem>>, vector<1x16x64xbf16>
    %36 = vector.shape_cast %35 : vector<1x16x64xbf16> to vector<16x64xbf16>
    %cst_32 = arith.constant dense<0.000000e+00> : vector<16x32xf32>
    %37 = tpu.matmul %36, %9, %cst_32 {dimension_numbers = #tpu.dot_dimension_numbers<[1], [0], [0], [1], [0, 0, 1, 1], [], []>} : vector<16x64xbf16>, vector<64x32xbf16>, vector<16x32xf32> -> vector<16x32xf32>
    %38 = arith.truncf %37 : vector<16x32xf32> to vector<16x32xbf16>
    %c3_33 = arith.constant 3 : index
    %c0_34 = arith.constant 0 : index
    %c0_35 = arith.constant 0 : index
    %39 = vector.load %arg5[%c3_33, %c0_34, %c0_35] : memref<9x32x64xbf16, #tpu.memory_space<vmem>>, vector<1x32x64xbf16>
    %40 = vector.shape_cast %39 : vector<1x32x64xbf16> to vector<32x64xbf16>
    %cst_36 = arith.constant dense<0.000000e+00> : vector<16x64xf32>
    %41 = tpu.matmul %38, %40, %cst_36 {dimension_numbers = #tpu.dot_dimension_numbers<[1], [0], [0], [1], [0, 0, 1, 1], [], []>} : vector<16x32xbf16>, vector<32x64xbf16>, vector<16x64xf32> -> vector<16x64xf32>
    %42 = arith.addf %34, %41 : vector<16x64xf32>
    %c4 = arith.constant 4 : index
    %c0_37 = arith.constant 0 : index
    %c0_38 = arith.constant 0 : index
    %43 = vector.load %arg4[%c4, %c0_37, %c0_38] : memref<9x16x64xbf16, #tpu.memory_space<vmem>>, vector<1x16x64xbf16>
    %44 = vector.shape_cast %43 : vector<1x16x64xbf16> to vector<16x64xbf16>
    %cst_39 = arith.constant dense<0.000000e+00> : vector<16x32xf32>
    %45 = tpu.matmul %44, %9, %cst_39 {dimension_numbers = #tpu.dot_dimension_numbers<[1], [0], [0], [1], [0, 0, 1, 1], [], []>} : vector<16x64xbf16>, vector<64x32xbf16>, vector<16x32xf32> -> vector<16x32xf32>
    %46 = arith.truncf %45 : vector<16x32xf32> to vector<16x32xbf16>
    %c4_40 = arith.constant 4 : index
    %c0_41 = arith.constant 0 : index
    %c0_42 = arith.constant 0 : index
    %47 = vector.load %arg5[%c4_40, %c0_41, %c0_42] : memref<9x32x64xbf16, #tpu.memory_space<vmem>>, vector<1x32x64xbf16>
    %48 = vector.shape_cast %47 : vector<1x32x64xbf16> to vector<32x64xbf16>
    %cst_43 = arith.constant dense<0.000000e+00> : vector<16x64xf32>
    %49 = tpu.matmul %46, %48, %cst_43 {dimension_numbers = #tpu.dot_dimension_numbers<[1], [0], [0], [1], [0, 0, 1, 1], [], []>} : vector<16x32xbf16>, vector<32x64xbf16>, vector<16x64xf32> -> vector<16x64xf32>
    %50 = arith.addf %42, %49 : vector<16x64xf32>
    %c5 = arith.constant 5 : index
    %c0_44 = arith.constant 0 : index
    %c0_45 = arith.constant 0 : index
    %51 = vector.load %arg4[%c5, %c0_44, %c0_45] : memref<9x16x64xbf16, #tpu.memory_space<vmem>>, vector<1x16x64xbf16>
    %52 = vector.shape_cast %51 : vector<1x16x64xbf16> to vector<16x64xbf16>
    %cst_46 = arith.constant dense<0.000000e+00> : vector<16x32xf32>
    %53 = tpu.matmul %52, %9, %cst_46 {dimension_numbers = #tpu.dot_dimension_numbers<[1], [0], [0], [1], [0, 0, 1, 1], [], []>} : vector<16x64xbf16>, vector<64x32xbf16>, vector<16x32xf32> -> vector<16x32xf32>
    %54 = arith.truncf %53 : vector<16x32xf32> to vector<16x32xbf16>
    %c5_47 = arith.constant 5 : index
    %c0_48 = arith.constant 0 : index
    %c0_49 = arith.constant 0 : index
    %55 = vector.load %arg5[%c5_47, %c0_48, %c0_49] : memref<9x32x64xbf16, #tpu.memory_space<vmem>>, vector<1x32x64xbf16>
    %56 = vector.shape_cast %55 : vector<1x32x64xbf16> to vector<32x64xbf16>
    %cst_50 = arith.constant dense<0.000000e+00> : vector<16x64xf32>
    %57 = tpu.matmul %54, %56, %cst_50 {dimension_numbers = #tpu.dot_dimension_numbers<[1], [0], [0], [1], [0, 0, 1, 1], [], []>} : vector<16x32xbf16>, vector<32x64xbf16>, vector<16x64xf32> -> vector<16x64xf32>
    %58 = arith.addf %50, %57 : vector<16x64xf32>
    %c6 = arith.constant 6 : index
    %c0_51 = arith.constant 0 : index
    %c0_52 = arith.constant 0 : index
    %59 = vector.load %arg4[%c6, %c0_51, %c0_52] : memref<9x16x64xbf16, #tpu.memory_space<vmem>>, vector<1x16x64xbf16>
    %60 = vector.shape_cast %59 : vector<1x16x64xbf16> to vector<16x64xbf16>
    %cst_53 = arith.constant dense<0.000000e+00> : vector<16x32xf32>
    %61 = tpu.matmul %60, %9, %cst_53 {dimension_numbers = #tpu.dot_dimension_numbers<[1], [0], [0], [1], [0, 0, 1, 1], [], []>} : vector<16x64xbf16>, vector<64x32xbf16>, vector<16x32xf32> -> vector<16x32xf32>
    %62 = arith.truncf %61 : vector<16x32xf32> to vector<16x32xbf16>
    %c6_54 = arith.constant 6 : index
    %c0_55 = arith.constant 0 : index
    %c0_56 = arith.constant 0 : index
    %63 = vector.load %arg5[%c6_54, %c0_55, %c0_56] : memref<9x32x64xbf16, #tpu.memory_space<vmem>>, vector<1x32x64xbf16>
    %64 = vector.shape_cast %63 : vector<1x32x64xbf16> to vector<32x64xbf16>
    %cst_57 = arith.constant dense<0.000000e+00> : vector<16x64xf32>
    %65 = tpu.matmul %62, %64, %cst_57 {dimension_numbers = #tpu.dot_dimension_numbers<[1], [0], [0], [1], [0, 0, 1, 1], [], []>} : vector<16x32xbf16>, vector<32x64xbf16>, vector<16x64xf32> -> vector<16x64xf32>
    %66 = arith.addf %58, %65 : vector<16x64xf32>
    %c7 = arith.constant 7 : index
    %c0_58 = arith.constant 0 : index
    %c0_59 = arith.constant 0 : index
    %67 = vector.load %arg4[%c7, %c0_58, %c0_59] : memref<9x16x64xbf16, #tpu.memory_space<vmem>>, vector<1x16x64xbf16>
    %68 = vector.shape_cast %67 : vector<1x16x64xbf16> to vector<16x64xbf16>
    %cst_60 = arith.constant dense<0.000000e+00> : vector<16x32xf32>
    %69 = tpu.matmul %68, %9, %cst_60 {dimension_numbers = #tpu.dot_dimension_numbers<[1], [0], [0], [1], [0, 0, 1, 1], [], []>} : vector<16x64xbf16>, vector<64x32xbf16>, vector<16x32xf32> -> vector<16x32xf32>
    %70 = arith.truncf %69 : vector<16x32xf32> to vector<16x32xbf16>
    %c7_61 = arith.constant 7 : index
    %c0_62 = arith.constant 0 : index
    %c0_63 = arith.constant 0 : index
    %71 = vector.load %arg5[%c7_61, %c0_62, %c0_63] : memref<9x32x64xbf16, #tpu.memory_space<vmem>>, vector<1x32x64xbf16>
    %72 = vector.shape_cast %71 : vector<1x32x64xbf16> to vector<32x64xbf16>
    %cst_64 = arith.constant dense<0.000000e+00> : vector<16x64xf32>
    %73 = tpu.matmul %70, %72, %cst_64 {dimension_numbers = #tpu.dot_dimension_numbers<[1], [0], [0], [1], [0, 0, 1, 1], [], []>} : vector<16x32xbf16>, vector<32x64xbf16>, vector<16x64xf32> -> vector<16x64xf32>
    %74 = arith.addf %66, %73 : vector<16x64xf32>
    %c8 = arith.constant 8 : index
    %c0_65 = arith.constant 0 : index
    %c0_66 = arith.constant 0 : index
    %75 = vector.load %arg4[%c8, %c0_65, %c0_66] : memref<9x16x64xbf16, #tpu.memory_space<vmem>>, vector<1x16x64xbf16>
    %76 = vector.shape_cast %75 : vector<1x16x64xbf16> to vector<16x64xbf16>
    %cst_67 = arith.constant dense<0.000000e+00> : vector<16x32xf32>
    %77 = tpu.matmul %76, %9, %cst_67 {dimension_numbers = #tpu.dot_dimension_numbers<[1], [0], [0], [1], [0, 0, 1, 1], [], []>} : vector<16x64xbf16>, vector<64x32xbf16>, vector<16x32xf32> -> vector<16x32xf32>
    %78 = arith.truncf %77 : vector<16x32xf32> to vector<16x32xbf16>
    %c8_68 = arith.constant 8 : index
    %c0_69 = arith.constant 0 : index
    %c0_70 = arith.constant 0 : index
    %79 = vector.load %arg5[%c8_68, %c0_69, %c0_70] : memref<9x32x64xbf16, #tpu.memory_space<vmem>>, vector<1x32x64xbf16>
    %80 = vector.shape_cast %79 : vector<1x32x64xbf16> to vector<32x64xbf16>
    %cst_71 = arith.constant dense<0.000000e+00> : vector<16x64xf32>
    %81 = tpu.matmul %78, %80, %cst_71 {dimension_numbers = #tpu.dot_dimension_numbers<[1], [0], [0], [1], [0, 0, 1, 1], [], []>} : vector<16x32xbf16>, vector<32x64xbf16>, vector<16x64xf32> -> vector<16x64xf32>
    %82 = arith.addf %74, %81 : vector<16x64xf32>
    %c0_72 = arith.constant 0 : index
    %c0_73 = arith.constant 0 : index
    %83 = vector.load %arg6[%c0_72, %c0_73] : memref<1x64xf32, #tpu.memory_space<vmem>>, vector<1x64xf32>
    %84 = vector.broadcast %83 : vector<1x64xf32> to vector<16x64xf32>
    %85 = arith.addf %82, %84 : vector<16x64xf32>
    %cst_74 = arith.constant 0.000000e+00 : f32
    %86 = vector.broadcast %cst_74 : f32 to vector<16x64xf32>
    %87 = arith.maximumf %85, %86 : vector<16x64xf32>
    %88 = vector.extract_strided_slice %87 {offsets = [0, 0], sizes = [1, 64], strides = [1, 1]} : vector<16x64xf32> to vector<1x64xf32>
    %c0_75 = arith.constant 0 : index
    %c0_76 = arith.constant 0 : index
    %89 = vector.load %arg12[%c0_75, %c0_76] : memref<1x1024xf32, #tpu.memory_space<vmem>>, vector<1x64xf32>
    tpu.vector_store %arg12[%c0_75, %c0_76], %88 {strides = array<i32>} : memref<1x1024xf32, #tpu.memory_space<vmem>>, vector<1x64xf32>,
    %90 = vector.extract_strided_slice %87 {offsets = [1, 0], sizes = [1, 64], strides = [1, 1]} : vector<16x64xf32> to vector<1x64xf32>
    %c0_77 = arith.constant 0 : index
    %c64 = arith.constant 64 : index
    %91 = vector.load %arg12[%c0_77, %c64] : memref<1x1024xf32, #tpu.memory_space<vmem>>, vector<1x64xf32>
    tpu.vector_store %arg12[%c0_77, %c64], %90 {strides = array<i32>} : memref<1x1024xf32, #tpu.memory_space<vmem>>, vector<1x64xf32>,
    %92 = vector.extract_strided_slice %87 {offsets = [2, 0], sizes = [1, 64], strides = [1, 1]} : vector<16x64xf32> to vector<1x64xf32>
    %c0_78 = arith.constant 0 : index
    %c128 = arith.constant 128 : index
    %93 = vector.load %arg12[%c0_78, %c128] : memref<1x1024xf32, #tpu.memory_space<vmem>>, vector<1x64xf32>
    tpu.vector_store %arg12[%c0_78, %c128], %92 {strides = array<i32>} : memref<1x1024xf32, #tpu.memory_space<vmem>>, vector<1x64xf32>,
    %94 = vector.extract_strided_slice %87 {offsets = [3, 0], sizes = [1, 64], strides = [1, 1]} : vector<16x64xf32> to vector<1x64xf32>
    %c0_79 = arith.constant 0 : index
    %c192 = arith.constant 192 : index
    %95 = vector.load %arg12[%c0_79, %c192] : memref<1x1024xf32, #tpu.memory_space<vmem>>, vector<1x64xf32>
    tpu.vector_store %arg12[%c0_79, %c192], %94 {strides = array<i32>} : memref<1x1024xf32, #tpu.memory_space<vmem>>, vector<1x64xf32>,
    %96 = vector.extract_strided_slice %87 {offsets = [4, 0], sizes = [1, 64], strides = [1, 1]} : vector<16x64xf32> to vector<1x64xf32>
    %c0_80 = arith.constant 0 : index
    %c256 = arith.constant 256 : index
    %97 = vector.load %arg12[%c0_80, %c256] : memref<1x1024xf32, #tpu.memory_space<vmem>>, vector<1x64xf32>
    tpu.vector_store %arg12[%c0_80, %c256], %96 {strides = array<i32>} : memref<1x1024xf32, #tpu.memory_space<vmem>>, vector<1x64xf32>,
    %98 = vector.extract_strided_slice %87 {offsets = [5, 0], sizes = [1, 64], strides = [1, 1]} : vector<16x64xf32> to vector<1x64xf32>
    %c0_81 = arith.constant 0 : index
    %c320 = arith.constant 320 : index
    %99 = vector.load %arg12[%c0_81, %c320] : memref<1x1024xf32, #tpu.memory_space<vmem>>, vector<1x64xf32>
    tpu.vector_store %arg12[%c0_81, %c320], %98 {strides = array<i32>} : memref<1x1024xf32, #tpu.memory_space<vmem>>, vector<1x64xf32>,
    %100 = vector.extract_strided_slice %87 {offsets = [6, 0], sizes = [1, 64], strides = [1, 1]} : vector<16x64xf32> to vector<1x64xf32>
    %c0_82 = arith.constant 0 : index
    %c384 = arith.constant 384 : index
    %101 = vector.load %arg12[%c0_82, %c384] : memref<1x1024xf32, #tpu.memory_space<vmem>>, vector<1x64xf32>
    tpu.vector_store %arg12[%c0_82, %c384], %100 {strides = array<i32>} : memref<1x1024xf32, #tpu.memory_space<vmem>>, vector<1x64xf32>,
    %102 = vector.extract_strided_slice %87 {offsets = [7, 0], sizes = [1, 64], strides = [1, 1]} : vector<16x64xf32> to vector<1x64xf32>
    %c0_83 = arith.constant 0 : index
    %c448 = arith.constant 448 : index
    %103 = vector.load %arg12[%c0_83, %c448] : memref<1x1024xf32, #tpu.memory_space<vmem>>, vector<1x64xf32>
    tpu.vector_store %arg12[%c0_83, %c448], %102 {strides = array<i32>} : memref<1x1024xf32, #tpu.memory_space<vmem>>, vector<1x64xf32>,
    %104 = vector.extract_strided_slice %87 {offsets = [8, 0], sizes = [1, 64], strides = [1, 1]} : vector<16x64xf32> to vector<1x64xf32>
    %c0_84 = arith.constant 0 : index
    %c512 = arith.constant 512 : index
    %105 = vector.load %arg12[%c0_84, %c512] : memref<1x1024xf32, #tpu.memory_space<vmem>>, vector<1x64xf32>
    tpu.vector_store %arg12[%c0_84, %c512], %104 {strides = array<i32>} : memref<1x1024xf32, #tpu.memory_space<vmem>>, vector<1x64xf32>,
    %106 = vector.extract_strided_slice %87 {offsets = [9, 0], sizes = [1, 64], strides = [1, 1]} : vector<16x64xf32> to vector<1x64xf32>
    %c0_85 = arith.constant 0 : index
    %c576 = arith.constant 576 : index
    %107 = vector.load %arg12[%c0_85, %c576] : memref<1x1024xf32, #tpu.memory_space<vmem>>, vector<1x64xf32>
    tpu.vector_store %arg12[%c0_85, %c576], %106 {strides = array<i32>} : memref<1x1024xf32, #tpu.memory_space<vmem>>, vector<1x64xf32>,
    %108 = vector.extract_strided_slice %87 {offsets = [10, 0], sizes = [1, 64], strides = [1, 1]} : vector<16x64xf32> to vector<1x64xf32>
    %c0_86 = arith.constant 0 : index
    %c640 = arith.constant 640 : index
    %109 = vector.load %arg12[%c0_86, %c640] : memref<1x1024xf32, #tpu.memory_space<vmem>>, vector<1x64xf32>
    tpu.vector_store %arg12[%c0_86, %c640], %108 {strides = array<i32>} : memref<1x1024xf32, #tpu.memory_space<vmem>>, vector<1x64xf32>,
    %110 = vector.extract_strided_slice %87 {offsets = [11, 0], sizes = [1, 64], strides = [1, 1]} : vector<16x64xf32> to vector<1x64xf32>
    %c0_87 = arith.constant 0 : index
    %c704 = arith.constant 704 : index
    %111 = vector.load %arg12[%c0_87, %c704] : memref<1x1024xf32, #tpu.memory_space<vmem>>, vector<1x64xf32>
    tpu.vector_store %arg12[%c0_87, %c704], %110 {strides = array<i32>} : memref<1x1024xf32, #tpu.memory_space<vmem>>, vector<1x64xf32>,
    %112 = vector.extract_strided_slice %87 {offsets = [12, 0], sizes = [1, 64], strides = [1, 1]} : vector<16x64xf32> to vector<1x64xf32>
    %c0_88 = arith.constant 0 : index
    %c768 = arith.constant 768 : index
    %113 = vector.load %arg12[%c0_88, %c768] : memref<1x1024xf32, #tpu.memory_space<vmem>>, vector<1x64xf32>
    tpu.vector_store %arg12[%c0_88, %c768], %112 {strides = array<i32>} : memref<1x1024xf32, #tpu.memory_space<vmem>>, vector<1x64xf32>,
    %114 = vector.extract_strided_slice %87 {offsets = [13, 0], sizes = [1, 64], strides = [1, 1]} : vector<16x64xf32> to vector<1x64xf32>
    %c0_89 = arith.constant 0 : index
    %c832 = arith.constant 832 : index
    %115 = vector.load %arg12[%c0_89, %c832] : memref<1x1024xf32, #tpu.memory_space<vmem>>, vector<1x64xf32>
    tpu.vector_store %arg12[%c0_89, %c832], %114 {strides = array<i32>} : memref<1x1024xf32, #tpu.memory_space<vmem>>, vector<1x64xf32>,
    %116 = vector.extract_strided_slice %87 {offsets = [14, 0], sizes = [1, 64], strides = [1, 1]} : vector<16x64xf32> to vector<1x64xf32>
    %c0_90 = arith.constant 0 : index
    %c896 = arith.constant 896 : index
    %117 = vector.load %arg12[%c0_90, %c896] : memref<1x1024xf32, #tpu.memory_space<vmem>>, vector<1x64xf32>
    tpu.vector_store %arg12[%c0_90, %c896], %116 {strides = array<i32>} : memref<1x1024xf32, #tpu.memory_space<vmem>>, vector<1x64xf32>,
    %118 = vector.extract_strided_slice %87 {offsets = [15, 0], sizes = [1, 64], strides = [1, 1]} : vector<16x64xf32> to vector<1x64xf32>
    %c0_91 = arith.constant 0 : index
    %c960 = arith.constant 960 : index
    %119 = vector.load %arg12[%c0_91, %c960] : memref<1x1024xf32, #tpu.memory_space<vmem>>, vector<1x64xf32>
    tpu.vector_store %arg12[%c0_91, %c960], %118 {strides = array<i32>} : memref<1x1024xf32, #tpu.memory_space<vmem>>, vector<1x64xf32>,
    %c0_92 = arith.constant 0 : index
    %c0_93 = arith.constant 0 : index
    %120 = vector.load %arg12[%c0_92, %c0_93] : memref<1x1024xf32, #tpu.memory_space<vmem>>, vector<1x1024xf32>
    %121 = arith.truncf %120 : vector<1x1024xf32> to vector<1x1024xbf16>
    %c0_94 = arith.constant 0 : index
    %c0_95 = arith.constant 0 : index
    %122 = vector.load %arg7[%c0_94, %c0_95] : memref<1024x64xbf16, #tpu.memory_space<vmem>>, vector<1024x64xbf16>
    %cst_96 = arith.constant dense<0.000000e+00> : vector<1x64xf32>
    %123 = tpu.matmul %121, %122, %cst_96 {dimension_numbers = #tpu.dot_dimension_numbers<[1], [0], [0], [1], [0, 0, 1, 1], [], []>} : vector<1x1024xbf16>, vector<1024x64xbf16>, vector<1x64xf32> -> vector<1x64xf32>
    %c0_97 = arith.constant 0 : index
    %c0_98 = arith.constant 0 : index
    %124 = vector.load %arg8[%c0_97, %c0_98] : memref<1x64xf32, #tpu.memory_space<vmem>>, vector<1x64xf32>
    %125 = arith.addf %123, %124 : vector<1x64xf32>
    %cst_99 = arith.constant 0.000000e+00 : f32
    %126 = vector.broadcast %cst_99 : f32 to vector<1x64xf32>
    %127 = arith.maximumf %125, %126 : vector<1x64xf32>
    %c0_100 = arith.constant 0 : index
    %c0_101 = arith.constant 0 : index
    %128 = vector.load %arg9[%c0_100, %c0_101] : memref<1x64xf32, #tpu.memory_space<vmem>>, vector<1x64xf32>
    %129 = arith.mulf %127, %128 : vector<1x64xf32>
    %cst_102 = arith.constant dense<0.000000e+00> : vector<1xf32>
    %130 = vector.multi_reduction <add>, %129, %cst_102 [1] : vector<1x64xf32> to vector<1xf32>
    %131 = vector.shape_cast %130 : vector<1xf32> to vector<1x1xf32>
    %c0_103 = arith.constant 0 : index
    %c0_104 = arith.constant 0 : index
    %132 = vector.load %arg10[%c0_103, %c0_104] : memref<1x1xf32, #tpu.memory_space<vmem>>, vector<1x1xf32>
    %133 = arith.addf %131, %132 : vector<1x1xf32>
    %c0_105 = arith.constant 0 : index
    %c0_106 = arith.constant 0 : index
    %c0_107 = arith.constant 0 : index
    %134 = vector.load %arg11[%c0_105, %c0_106, %c0_107] : memref<1x1x1xf32, #tpu.memory_space<vmem>>, vector<1x1x1xf32>
    %135 = vector.shape_cast %134 : vector<1x1x1xf32> to vector<1x1xf32>
    %136 = vector.shape_cast %133 : vector<1x1xf32> to vector<1x1x1xf32>
    tpu.vector_store %arg11[%c0_105, %c0_106, %c0_107], %136 {strides = array<i32>} : memref<1x1x1xf32, #tpu.memory_space<vmem>>, vector<1x1x1xf32>,
    return
  }
  func.func @transform_0(%arg0: i32) -> (i32, i32, i32) {
    %c0_i32 = arith.constant 0 : i32
    %c0_i32_0 = arith.constant 0 : i32
    %c0_i32_1 = arith.constant 0 : i32
    return %arg0, %c0_i32, %c0_i32_0 : i32, i32, i32
  }
  func.func @transform_1(%arg0: i32) -> (i32, i32) {
    %c0_i32 = arith.constant 0 : i32
    %c0_i32_0 = arith.constant 0 : i32
    %c0_i32_1 = arith.constant 0 : i32
    return %c0_i32, %c0_i32_0 : i32, i32
  }
  func.func @transform_2(%arg0: i32) -> (i32, i32) {
    %c0_i32 = arith.constant 0 : i32
    %c0_i32_0 = arith.constant 0 : i32
    %c0_i32_1 = arith.constant 0 : i32
    return %c0_i32, %c0_i32_0 : i32, i32
  }
  func.func @transform_3(%arg0: i32) -> (i32, i32, i32) {
    %c0_i32 = arith.constant 0 : i32
    %c0_i32_0 = arith.constant 0 : i32
    %c0_i32_1 = arith.constant 0 : i32
    %c0_i32_2 = arith.constant 0 : i32
    return %c0_i32, %c0_i32_0, %c0_i32_1 : i32, i32, i32
  }
  func.func @transform_4(%arg0: i32) -> (i32, i32, i32) {
    %c0_i32 = arith.constant 0 : i32
    %c0_i32_0 = arith.constant 0 : i32
    %c0_i32_1 = arith.constant 0 : i32
    %c0_i32_2 = arith.constant 0 : i32
    return %c0_i32, %c0_i32_0, %c0_i32_1 : i32, i32, i32
  }
  func.func @transform_5(%arg0: i32) -> (i32, i32) {
    %c0_i32 = arith.constant 0 : i32
    %c0_i32_0 = arith.constant 0 : i32
    %c0_i32_1 = arith.constant 0 : i32
    return %c0_i32, %c0_i32_0 : i32, i32
  }
  func.func @transform_6(%arg0: i32) -> (i32, i32) {
    %c0_i32 = arith.constant 0 : i32
    %c0_i32_0 = arith.constant 0 : i32
    %c0_i32_1 = arith.constant 0 : i32
    return %c0_i32, %c0_i32_0 : i32, i32
  }
  func.func @transform_7(%arg0: i32) -> (i32, i32) {
    %c0_i32 = arith.constant 0 : i32
    %c0_i32_0 = arith.constant 0 : i32
    %c0_i32_1 = arith.constant 0 : i32
    return %c0_i32, %c0_i32_0 : i32, i32
  }
  func.func @transform_8(%arg0: i32) -> (i32, i32) {
    %c0_i32 = arith.constant 0 : i32
    %c0_i32_0 = arith.constant 0 : i32
    %c0_i32_1 = arith.constant 0 : i32
    return %c0_i32, %c0_i32_0 : i32, i32
  }
  func.func @transform_9(%arg0: i32) -> (i32, i32) {
    %c0_i32 = arith.constant 0 : i32
    %c0_i32_0 = arith.constant 0 : i32
    %c0_i32_1 = arith.constant 0 : i32
    return %c0_i32, %c0_i32_0 : i32, i32
  }
  func.func @transform_10(%arg0: i32) -> (i32, i32, i32) {
    %c0_i32 = arith.constant 0 : i32
    %c0_i32_0 = arith.constant 0 : i32
    %c0_i32_1 = arith.constant 0 : i32
    return %arg0, %c0_i32, %c0_i32_0 : i32, i32, i32
  }
}

</mosaic_0001>

<llo_original>
// kernel: cifar10net_forward.1
$region0: #{cifar10net_forward.1}
  #allocation0 [shape = 'u32[]', space=smem, size = 0x4, offset = 0x4, fixed_abs, tag = 'smem constant byte address 0x4 - core index']
  #allocation1 [shape = 'u32[144,128]{1,0:T(1,128)}', space=vmem, size = 0x12000, scoped, tag = 'internal scratch']
  #allocation2 [shape = 'f32[1,1024]{1,0:T(1,128)}', space=vmem, size = 0x1000, scoped, tag = 'scratch operand']
  #allocation3 [shape = 'f32[1,1]{1,0:T(1,128)S(1)}', space=vmem, size = 0x200, scoped, tag = 'scoped memory for cifar10net_forward.1']
  %s0 = inlined_call_operand.vmem [shape: bf16[2,64,32], index: 0, kind: input, shape index: {}]
  %s1 = inlined_call_operand.vmem [shape: bf16[32,32], index: 1, kind: input, shape index: {}]
  %s2 = inlined_call_operand.vmem [shape: f32[1,32], index: 2, kind: input, shape index: {}]
  %s3 = inlined_call_operand.vmem [shape: bf16[9,16,64], index: 3, kind: input, shape index: {}]
  %s4 = inlined_call_operand.vmem [shape: bf16[9,32,64], index: 4, kind: input, shape index: {}]
  %s5 = inlined_call_operand.vmem [shape: f32[1,64], index: 5, kind: input, shape index: {}]
  %s6 = inlined_call_operand.vmem [shape: bf16[1024,64], index: 6, kind: input, shape index: {}]
  %s7 = inlined_call_operand.vmem [shape: f32[1,64], index: 7, kind: input, shape index: {}]
  %s8 = inlined_call_operand.vmem [shape: f32[1,64], index: 8, kind: input, shape index: {}]
  %s9 = inlined_call_operand.<no memory space> [shape: f32[1,1], index: 9, kind: input, shape index: {}]
  %s10 = inlined_call_operand.vmem [shape: f32[2,1,1], index: 10, kind: output, shape index: {}]
  %s11 = sld [smem:[#allocation0]]
  $region73: #{cifar10net_forward.1} parent=0
    _
  %s13 = ssub.s32 1, %s11
  %s14 = scalar_select 0, %s13, %s11
  %v15 = vstv %s9
  %16 = vst [vmem:[#allocation3] sm:$0x1] %v15
  loop: start=0, step=1, limit=4
  $region2: #{cifar10net_forward.1} parent=0 // loop_pre_header
    _
  $region3: #{cifar10net_forward.1} parent=0 // loop_header
    %s18 = sphi 0, %s22
    %p19 = scmp.ge.s32.totalorder %s18, 4
    %s28 = sphi 0, %s30
    %s31 = sphi 0, %s28
    %s32 = sphi 0, %s31
    %s48 = sphi 0, %s32
    %s52 = sphi 0, %s52
    %s54 = sphi 0, %s52
    %s55 = sphi 0, %s54
    %s69 = sphi 0, %s55
    %s73 = sphi 0, %s73
    %s75 = sphi 0, %s73
    %s76 = sphi 0, %s75
    %s90 = sphi 0, %s76
    %s94 = sphi 0, %s94
    %s96 = sphi 0, %s94
    %s97 = sphi 0, %s96
    %s111 = sphi 0, %s97
    %s115 = sphi 0, %s115
    %s117 = sphi 0, %s115
    %s118 = sphi 0, %s117
    %s132 = sphi 0, %s118
    %s136 = sphi 0, %s136
    %s138 = sphi 0, %s136
    %s139 = sphi 0, %s138
    %s153 = sphi 0, %s139
    %s157 = sphi 0, %s157
    %s159 = sphi 0, %s157
    %s160 = sphi 0, %s159
    %s174 = sphi 0, %s160
    %s178 = sphi 0, %s178
    %s180 = sphi 0, %s178
    %s181 = sphi 0, %s180
    %s195 = sphi 0, %s181
    %s199 = sphi 0, %s199
    %s201 = sphi 0, %s199
    %s202 = sphi 0, %s201
    %s216 = sphi 0, %s202
    %s220 = sphi 0, %s220
    %s222 = sphi 0, %s220
    %s223 = sphi 0, %s222
    %s237 = sphi 0, %s223
    %s243 = sphi 0, %s245
    %s246 = sphi 0, %s243
    %s247 = sphi 0, %s246
    %s263 = sphi 0, %s247
  $region4: #{cifar10net_forward.1} parent=0 // loop_header_branch
    %21 = sbr.rel (%p19) target = $region8
  $region5: #{cifar10net_forward.1} parent=0 // loop_body
    %s23 = ssub.s32 %s18, 1
    %s24 = ssub.s32 %s18, 2
    %s25 = sadd.s32 %s18, 1
    %s26 = ssub.s32 %s18, %s25
    %p27 = scmp.eq.s32.totalorder %s26, 0
    %s29 = sadd.s32 %s28, 1
    %s30 = scalar_select %p27, %s28, %s29
    %p33 = pneg %p27
    %p34 = scmp.eq.s32.totalorder %s18, 1
    %p35 = por %p33, %p34
    %p36 = scmp.ne.s32.totalorder %s28, %s31
    %p37 = scmp.eq.s32.totalorder %s18, 0
    %p38 = por %p36, %p37
    %p39 = scmp.ne.s32.totalorder %s28, %s31
    %p40 = scmp.eq.s32.totalorder %s23, 1
    %p41 = por %p39, %p40
    %p42 = scmp.ne.s32.totalorder %s31, %s32
    %p43 = scmp.eq.s32.totalorder %s23, 0
    %p44 = por %p42, %p43
    %p45 = scmp.ne.s32.totalorder %s31, %s32
    %p46 = scmp.eq.s32.totalorder %s24, 1
    %p47 = por %p45, %p46
    %p49 = scmp.ne.s32.totalorder %s32, %s48
    %p50 = scmp.eq.s32.totalorder %s24, 0
    %p51 = por %p49, %p50
    %s53 = sadd.s32 %s52, 1
    %p56 = scmp.eq.s32.totalorder %s18, 1
    %p57 = scmp.ne.s32.totalorder %s52, %s54
    %p58 = scmp.eq.s32.totalorder %s18, 0
    %p59 = por %p57, %p58
    %p60 = scmp.ne.s32.totalorder %s52, %s54
    %p61 = scmp.eq.s32.totalorder %s23, 1
    %p62 = por %p60, %p61
    %p63 = scmp.ne.s32.totalorder %s54, %s55
    %p64 = scmp.eq.s32.totalorder %s23, 0
    %p65 = por %p63, %p64
    %p66 = scmp.ne.s32.totalorder %s54, %s55
    %p67 = scmp.eq.s32.totalorder %s24, 1
    %p68 = por %p66, %p67
    %p70 = scmp.ne.s32.totalorder %s55, %s69
    %p71 = scmp.eq.s32.totalorder %s24, 0
    %p72 = por %p70, %p71
    %s74 = sadd.s32 %s73, 1
    %p77 = scmp.eq.s32.totalorder %s18, 1
    %p78 = scmp.ne.s32.totalorder %s73, %s75
    %p79 = scmp.eq.s32.totalorder %s18, 0
    %p80 = por %p78, %p79
    %p81 = scmp.ne.s32.totalorder %s73, %s75
    %p82 = scmp.eq.s32.totalorder %s23, 1
    %p83 = por %p81, %p82
    %p84 = scmp.ne.s32.totalorder %s75, %s76
    %p85 = scmp.eq.s32.totalorder %s23, 0
    %p86 = por %p84, %p85
    %p87 = scmp.ne.s32.totalorder %s75, %s76
    %p88 = scmp.eq.s32.totalorder %s24, 1
    %p89 = por %p87, %p88
    %p91 = scmp.ne.s32.totalorder %s76, %s90
    %p92 = scmp.eq.s32.totalorder %s24, 0
    %p93 = por %p91, %p92
    %s95 = sadd.s32 %s94, 1
    %p98 = scmp.eq.s32.totalorder %s18, 1
    %p99 = scmp.ne.s32.totalorder %s94, %s96
    %p100 = scmp.eq.s32.totalorder %s18, 0
    %p101 = por %p99, %p100
    %p102 = scmp.ne.s32.totalorder %s94, %s96
    %p103 = scmp.eq.s32.totalorder %s23, 1
    %p104 = por %p102, %p103
    %p105 = scmp.ne.s32.totalorder %s96, %s97
    %p106 = scmp.eq.s32.totalorder %s23, 0
    %p107 = por %p105, %p106
    %p108 = scmp.ne.s32.totalorder %s96, %s97
    %p109 = scmp.eq.s32.totalorder %s24, 1
    %p110 = por %p108, %p109
    %p112 = scmp.ne.s32.totalorder %s97, %s111
    %p113 = scmp.eq.s32.totalorder %s24, 0
    %p114 = por %p112, %p113
    %s116 = sadd.s32 %s115, 1
    %p119 = scmp.eq.s32.totalorder %s18, 1
    %p120 = scmp.ne.s32.totalorder %s115, %s117
    %p121 = scmp.eq.s32.totalorder %s18, 0
    %p122 = por %p120, %p121
    %p123 = scmp.ne.s32.totalorder %s115, %s117
    %p124 = scmp.eq.s32.totalorder %s23, 1
    %p125 = por %p123, %p124
    %p126 = scmp.ne.s32.totalorder %s117, %s118
    %p127 = scmp.eq.s32.totalorder %s23, 0
    %p128 = por %p126, %p127
    %p129 = scmp.ne.s32.totalorder %s117, %s118
    %p130 = scmp.eq.s32.totalorder %s24, 1
    %p131 = por %p129, %p130
    %p133 = scmp.ne.s32.totalorder %s118, %s132
    %p134 = scmp.eq.s32.totalorder %s24, 0
    %p135 = por %p133, %p134
    %s137 = sadd.s32 %s136, 1
    %p140 = scmp.eq.s32.totalorder %s18, 1
    %p141 = scmp.ne.s32.totalorder %s136, %s138
    %p142 = scmp.eq.s32.totalorder %s18, 0
    %p143 = por %p141, %p142
    %p144 = scmp.ne.s32.totalorder %s136, %s138
    %p145 = scmp.eq.s32.totalorder %s23, 1
    %p146 = por %p144, %p145
    %p147 = scmp.ne.s32.totalorder %s138, %s139
    %p148 = scmp.eq.s32.totalorder %s23, 0
    %p149 = por %p147, %p148
    %p150 = scmp.ne.s32.totalorder %s138, %s139
    %p151 = scmp.eq.s32.totalorder %s24, 1
    %p152 = por %p150, %p151
    %p154 = scmp.ne.s32.totalorder %s139, %s153
    %p155 = scmp.eq.s32.totalorder %s24, 0
    %p156 = por %p154, %p155
    %s158 = sadd.s32 %s157, 1
    %p161 = scmp.eq.s32.totalorder %s18, 1
    %p162 = scmp.ne.s32.totalorder %s157, %s159
    %p163 = scmp.eq.s32.totalorder %s18, 0
    %p164 = por %p162, %p163
    %p165 = scmp.ne.s32.totalorder %s157, %s159
    %p166 = scmp.eq.s32.totalorder %s23, 1
    %p167 = por %p165, %p166
    %p168 = scmp.ne.s32.totalorder %s159, %s160
    %p169 = scmp.eq.s32.totalorder %s23, 0
    %p170 = por %p168, %p169
    %p171 = scmp.ne.s32.totalorder %s159, %s160
    %p172 = scmp.eq.s32.totalorder %s24, 1
    %p173 = por %p171, %p172
    %p175 = scmp.ne.s32.totalorder %s160, %s174
    %p176 = scmp.eq.s32.totalorder %s24, 0
    %p177 = por %p175, %p176
    %s179 = sadd.s32 %s178, 1
    %p182 = scmp.eq.s32.totalorder %s18, 1
    %p183 = scmp.ne.s32.totalorder %s178, %s180
    %p184 = scmp.eq.s32.totalorder %s18, 0
    %p185 = por %p183, %p184
    %p186 = scmp.ne.s32.totalorder %s178, %s180
    %p187 = scmp.eq.s32.totalorder %s23, 1
    %p188 = por %p186, %p187
    %p189 = scmp.ne.s32.totalorder %s180, %s181
    %p190 = scmp.eq.s32.totalorder %s23, 0
    %p191 = por %p189, %p190
    %p192 = scmp.ne.s32.totalorder %s180, %s181
    %p193 = scmp.eq.s32.totalorder %s24, 1
    %p194 = por %p192, %p193
    %p196 = scmp.ne.s32.totalorder %s181, %s195
    %p197 = scmp.eq.s32.totalorder %s24, 0
    %p198 = por %p196, %p197
    %s200 = sadd.s32 %s199, 1
    %p203 = scmp.eq.s32.totalorder %s18, 1
    %p204 = scmp.ne.s32.totalorder %s199, %s201
    %p205 = scmp.eq.s32.totalorder %s18, 0
    %p206 = por %p204, %p205
    %p207 = scmp.ne.s32.totalorder %s199, %s201
    %p208 = scmp.eq.s32.totalorder %s23, 1
    %p209 = por %p207, %p208
    %p210 = scmp.ne.s32.totalorder %s201, %s202
    %p211 = scmp.eq.s32.totalorder %s23, 0
    %p212 = por %p210, %p211
    %p213 = scmp.ne.s32.totalorder %s201, %s202
    %p214 = scmp.eq.s32.totalorder %s24, 1
    %p215 = por %p213, %p214
    %p217 = scmp.ne.s32.totalorder %s202, %s216
    %p218 = scmp.eq.s32.totalorder %s24, 0
    %p219 = por %p217, %p218
    %s221 = sadd.s32 %s220, 1
    %p224 = scmp.eq.s32.totalorder %s18, 1
    %p225 = scmp.ne.s32.totalorder %s220, %s222
    %p226 = scmp.eq.s32.totalorder %s18, 0
    %p227 = por %p225, %p226
    %p228 = scmp.ne.s32.totalorder %s220, %s222
    %p229 = scmp.eq.s32.totalorder %s23, 1
    %p230 = por %p228, %p229
    %p231 = scmp.ne.s32.totalorder %s222, %s223
    %p232 = scmp.eq.s32.totalorder %s23, 0
    %p233 = por %p231, %p232
    %p234 = scmp.ne.s32.totalorder %s222, %s223
    %p235 = scmp.eq.s32.totalorder %s24, 1
    %p236 = por %p234, %p235
    %p238 = scmp.ne.s32.totalorder %s223, %s237
    %p239 = scmp.eq.s32.totalorder %s24, 0
    %p240 = por %p238, %p239
    %s241 = ssub.s32 %s18, %s25
    %p242 = scmp.eq.s32.totalorder %s241, 0
    %s244 = sadd.s32 %s243, 1
    %s245 = scalar_select %p242, %s243, %s244
    %p248 = pneg %p242
    %p249 = scmp.eq.s32.totalorder %s18, 1
    %p250 = por %p248, %p249
    %p251 = scmp.ne.s32.totalorder %s243, %s246
    %p252 = scmp.eq.s32.totalorder %s18, 0
    %p253 = por %p251, %p252
    %p254 = scmp.ne.s32.totalorder %s243, %s246
    %p255 = scmp.eq.s32.totalorder %s23, 1
    %p256 = por %p254, %p255
    %p257 = scmp.ne.s32.totalorder %s246, %s247
    %p258 = scmp.eq.s32.totalorder %s23, 0
    %p259 = por %p257, %p258
    %p260 = scmp.ne.s32.totalorder %s246, %s247
    %p261 = scmp.eq.s32.totalorder %s24, 1
    %p262 = por %p260, %p261
    %p264 = scmp.ne.s32.totalorder %s247, %s263
    %p265 = scmp.eq.s32.totalorder %s24, 0
    %p266 = por %p264, %p265
    %p267 = scmp.le.s32.totalorder 1, %s18
    %p268 = scmp.lt.s32.totalorder %s18, 3
    %p269 = pnand %p267, %p268
    %p270 = pneg %p269
    // Predicated region
    $region9: #{cifar10net_forward.1} parent=5 // pred_check
      _
    $region10: #{cifar10net_forward.1} parent=5 // pred_check_branch
      %272 = sbr.rel (%p269) target = $region12
    $region11: #{cifar10net_forward.1} parent=5 // pred_region
      %s273 = ssub.s32 %s18, 1
      // Predicated region
      $region13: #{cifar10net_forward.1} parent=11 // pred_check
        %p274 = pneg %p65
      $region14: #{cifar10net_forward.1} parent=11 // pred_check_branch
        %276 = sbr.rel (%p274) target = $region16
      $region15: #{cifar10net_forward.1} parent=11 // pred_region
        _
      $region16: #{cifar10net_forward.1} parent=11 // pred_fallthru
        _
      // Predicated region
      $region17: #{cifar10net_forward.1} parent=11 // pred_check
        %p277 = pneg %p86
      $region18: #{cifar10net_forward.1} parent=11 // pred_check_branch
        %279 = sbr.rel (%p277) target = $region20
      $region19: #{cifar10net_forward.1} parent=11 // pred_region
        _
      $region20: #{cifar10net_forward.1} parent=11 // pred_fallthru
        _
      // Predicated region
      $region21: #{cifar10net_forward.1} parent=11 // pred_check
        %p280 = pneg %p107
      $region22: #{cifar10net_forward.1} parent=11 // pred_check_branch
        %282 = sbr.rel (%p280) target = $region24
      $region23: #{cifar10net_forward.1} parent=11 // pred_region
        _
      $region24: #{cifar10net_forward.1} parent=11 // pred_fallthru
        _
      // Predicated region
      $region25: #{cifar10net_forward.1} parent=11 // pred_check
        %p283 = pneg %p128
      $region26: #{cifar10net_forward.1} parent=11 // pred_check_branch
        %285 = sbr.rel (%p283) target = $region28
      $region27: #{cifar10net_forward.1} parent=11 // pred_region
        _
      $region28: #{cifar10net_forward.1} parent=11 // pred_fallthru
        _
      // Predicated region
      $region29: #{cifar10net_forward.1} parent=11 // pred_check
        %p286 = pneg %p149
      $region30: #{cifar10net_forward.1} parent=11 // pred_check_branch
        %288 = sbr.rel (%p286) target = $region32
      $region31: #{cifar10net_forward.1} parent=11 // pred_region
        _
      $region32: #{cifar10net_forward.1} parent=11 // pred_fallthru
        _
      // Predicated region
      $region33: #{cifar10net_forward.1} parent=11 // pred_check
        %p289 = pneg %p170
      $region34: #{cifar10net_forward.1} parent=11 // pred_check_branch
        %291 = sbr.rel (%p289) target = $region36
      $region35: #{cifar10net_forward.1} parent=11 // pred_region
        _
      $region36: #{cifar10net_forward.1} parent=11 // pred_fallthru
        _
      // Predicated region
      $region37: #{cifar10net_forward.1} parent=11 // pred_check
        %p292 = pneg %p191
      $region38: #{cifar10net_forward.1} parent=11 // pred_check_branch
        %294 = sbr.rel (%p292) target = $region40
      $region39: #{cifar10net_forward.1} parent=11 // pred_region
        _
      $region40: #{cifar10net_forward.1} parent=11 // pred_fallthru
        _
      // Predicated region
      $region41: #{cifar10net_forward.1} parent=11 // pred_check
        %p295 = pneg %p212
      $region42: #{cifar10net_forward.1} parent=11 // pred_check_branch
        %297 = sbr.rel (%p295) target = $region44
      $region43: #{cifar10net_forward.1} parent=11 // pred_region
        _
      $region44: #{cifar10net_forward.1} parent=11 // pred_fallthru
        _
      // Predicated region
      $region45: #{cifar10net_forward.1} parent=11 // pred_check
        %p298 = pneg %p233
      $region46: #{cifar10net_forward.1} parent=11 // pred_check_branch
        %300 = sbr.rel (%p298) target = $region48
      $region47: #{cifar10net_forward.1} parent=11 // pred_region
        _
      $region48: #{cifar10net_forward.1} parent=11 // pred_fallthru
        _
    $region12: #{cifar10net_forward.1} parent=5 // pred_fallthru
      _
    %p301 = scmp.lt.s32.totalorder %s18, 2
    // Predicated region
    $region49: #{cifar10net_forward.1} parent=5 // pred_check
      %p302 = pneg %p301
    $region50: #{cifar10net_forward.1} parent=5 // pred_check_branch
      %304 = sbr.rel (%p302) target = $region52
    $region51: #{cifar10net_forward.1} parent=5 // pred_region
      // Predicated region
      $region53: #{cifar10net_forward.1} parent=51 // pred_check
        %p305 = pneg %p38
      $region54: #{cifar10net_forward.1} parent=51 // pred_check_branch
        %307 = sbr.rel (%p305) target = $region56
      $region55: #{cifar10net_forward.1} parent=51 // pred_region
        %p308 = scmp.lt.s32.totalorder %s18, 1
        %s309 = scalar_select %p308, %s18, 1
        %s310 = smul.addr %s309, 8
        %s311 = smul.addr %s310, 4
        %s312 = scalar_lea.vmem %s0, %s311
      $region56: #{cifar10net_forward.1} parent=51 // pred_fallthru
        _
    $region52: #{cifar10net_forward.1} parent=5 // pred_fallthru
      _
    %p313 = scmp.le.s32.totalorder 1, %s18
    %p314 = scmp.lt.s32.totalorder %s18, 3
    %p315 = pnand %p313, %p314
    %p316 = pneg %p315
    // Predicated region
    $region57: #{cifar10net_forward.1} parent=5 // pred_check
      _
    $region58: #{cifar10net_forward.1} parent=5 // pred_check_branch
      %318 = sbr.rel (%p315) target = $region60
    $region59: #{cifar10net_forward.1} parent=5 // pred_region
      %s319 = ssub.s32 %s18, 1
      %p320 = scmp.lt.s32.totalorder %s23, 1
      %s321 = scalar_select %p320, %s23, 1
      %s322 = smul.addr %s321, 8
      %s323 = smul.addr %s322, 4
      %s324 = scalar_lea.vmem %s0, %s323
      %p325 = pneg %p44
      %p326 = pneg %p41
      %p327 = pneg %p65
      %p328 = pneg %p62
      %p329 = pneg %p86
      %p330 = pneg %p83
      %p331 = pneg %p107
      %p332 = pneg %p104
      %p333 = pneg %p128
      %p334 = pneg %p125
      %p335 = pneg %p149
      %p336 = pneg %p146
      %p337 = pneg %p170
      %p338 = pneg %p167
      %p339 = pneg %p191
      %p340 = pneg %p188
      %p341 = pneg %p212
      %p342 = pneg %p209
      %p343 = pneg %p233
      %p344 = pneg %p230
      %p345 = pneg %p259
      %p346 = pneg %p256
      %p347 = scmp.lt.s32.totalorder %s23, 1
      %s348 = scalar_select %p347, %s23, 1
      %s349 = scalar_lea.vmem %s10, %s348
      %p350 = scmp.lt.s32.totalorder %s23, 1
      %s351 = scalar_select %p350, %s23, 1
      %s352 = smul.addr %s351, 8
      %s353 = smul.addr %s352, 4
      %s354 = scalar_lea.vmem %s0, %s353
      %p355 = scmp.lt.s32.totalorder %s23, 1
      %s356 = scalar_select %p355, %s23, 1
      %s357 = scalar_lea.vmem %s10, %s356
      %v359 = vld [vmem:[%s354] sm:$0xf]
      %v360 = vld [vmem:[%s354 + $0x4] sm:$0xf]
      %v361 = vld [vmem:[%s354 + $0x8] sm:$0xf]
      %v362 = vld [vmem:[%s354 + $0xc] sm:$0xf]
      %v363 = vld [vmem:[%s354 + $0x10] sm:$0xf]
      %v364 = vld [vmem:[%s354 + $0x14] sm:$0xf]
      %v365 = vld [vmem:[%s354 + $0x18] sm:$0xf]
      %v366 = vld [vmem:[%s354 + $0x1c] sm:$0xf]
      %v367 = vld [vmem:[%s1] sm:$0xf]
      %v368 = vld [vmem:[%s1 + $0x4] sm:$0xf]
      %v369 = vld [vmem:[%s1 + $0x8] sm:$0xf]
      %v370 = vld [vmem:[%s1 + $0xc] sm:$0xf]
      %v371 = vld [vmem:[%s2] sm:$0x1]
      %v373 = vlaneseq
      %v374 = vshrl.u32 %v373, 7
      %v375 = vsub.s32 0, %v374
      %v376 = vrot.slane %v371, %v375
      %v386 = vunpack.c.l.b16 %v359
      %v387 = vunpack.c.l.b16 %v360
      %v388 = vunpack.c.l.b16 %v361
      %v389 = vunpack.c.l.b16 %v362
      %v390 = vunpack.c.l.b16 %v363
      %v391 = vunpack.c.l.b16 %v364
      %v392 = vunpack.c.l.b16 %v365
      %v393 = vunpack.c.l.b16 %v366
      %v394 = vpack.c.b16 %v387, %v386
      %v395 = vpack.c.b16 %v389, %v388
      %v396 = vpack.c.b16 %v391, %v390
      %v397 = vpack.c.b16 %v393, %v392
      %v402 = vunpack.c.l.b16 %v367
      %v403 = vunpack.c.l.b16 %v368
      %v404 = vunpack.c.l.b16 %v369
      %v405 = vunpack.c.l.b16 %v370
      %v406 = vpack.c.b16 %v403, %v402
      %v407 = vpack.c.b16 %v405, %v404
      %vm410 = vcmask 261120
      %v412 = vsel %vm410, %v394, 0
      %v415 = vsel %vm410, %v395, 0
      %v418 = vsel %vm410, %v396, 0
      %v421 = vsel %vm410, %v397, 0
      %423 = vmatprep.subr.bf16.mxu0 0
      %424 = vmatpush1.bf16.msra.mxu0 %v406
      %425 = vmatprep.subr.bf16.mxu0 0
      %426 = vmatpush1.bf16.msra.mxu0 %v407
      %427 = vmatprep.subr.bf16.mxu0 0
      %428 = vmatpush1.bf16.msra.mxu0 0
      %429 = vmatprep.subr.bf16.mxu0 0
      %430 = vmatpush1.bf16.msra.mxu0 0
      %431 = vmatprep.subr.bf16.mxu0 0
      %432 = vmatpush1.bf16.msra.mxu0 0
      %433 = vmatprep.subr.bf16.mxu0 0
      %434 = vmatpush1.bf16.msra.mxu0 0
      %435 = vmatprep.subr.bf16.mxu0 0
      %436 = vmatpush1.bf16.msra.mxu0 0
      %437 = vmatprep.subr.bf16.mxu0 0
      %438 = vmatpush1.bf16.msra.mxu0 0
      %439 = vmatprep.subr.bf16.mxu0 0
      %440 = vmatpush1.bf16.msra.mxu0 0
      %441 = vmatprep.subr.bf16.mxu0 0
      %442 = vmatpush1.bf16.msra.mxu0 0
      %443 = vmatprep.subr.bf16.mxu0 0
      %444 = vmatpush1.bf16.msra.mxu0 0
      %445 = vmatprep.subr.bf16.mxu0 0
      %446 = vmatpush1.bf16.msra.mxu0 0
      %447 = vmatprep.subr.bf16.mxu0 0
      %448 = vmatpush1.bf16.msra.mxu0 0
      %449 = vmatprep.subr.bf16.mxu0 0
      %450 = vmatpush1.bf16.msra.mxu0 0
      %451 = vmatprep.subr.bf16.mxu0 0
      %452 = vmatpush1.bf16.msra.mxu0 0
      %453 = vmatprep.subr.bf16.mxu0 0
      %454 = vmatpush1.bf16.msra.mxu0 0
      %455 = vmatprep.mubr.bf16.mxu0 0
      %456 = vmatmul.mubr.bf16.gmra.mrb[0].mxu0 %v412
      %v457 = vpop.f32.mrb[0].mxu0
      %v458 = vadd.f32 %v376, %v457
      %v459 = vpop.f32.mrb[0].mxu0
      %v460 = vpop.f32.mrb[0].mxu0
      %v461 = vadd.f32 %v376, %v460
      %v462 = vpop.f32.mrb[0].mxu0
      %463 = vmatprep.mubr.bf16.mxu0 0
      %464 = vmatmul.mubr.bf16.gmra.mrb[0].mxu0 %v415
      %v465 = vpop.f32.mrb[0].mxu0
      %v466 = vadd.f32 %v376, %v465
      %v467 = vpop.f32.mrb[0].mxu0
      %v468 = vpop.f32.mrb[0].mxu0
      %v469 = vadd.f32 %v376, %v468
      %v470 = vpop.f32.mrb[0].mxu0
      %471 = vmatprep.mubr.bf16.mxu0 0
      %472 = vmatmul.mubr.bf16.gmra.mrb[0].mxu0 %v418
      %v473 = vpop.f32.mrb[0].mxu0
      %v474 = vadd.f32 %v376, %v473
      %v475 = vpop.f32.mrb[0].mxu0
      %v476 = vpop.f32.mrb[0].mxu0
      %v477 = vadd.f32 %v376, %v476
      %v478 = vpop.f32.mrb[0].mxu0
      %479 = vmatprep.mubr.bf16.mxu0 0
      %480 = vmatmul.mubr.bf16.gmra.mrb[0].mxu0 %v421
      %v481 = vpop.f32.mrb[0].mxu0
      %v482 = vadd.f32 %v376, %v481
      %v483 = vpop.f32.mrb[0].mxu0
      %v484 = vpop.f32.mrb[0].mxu0
      %v485 = vadd.f32 %v376, %v484
      %v486 = vpop.f32.mrb[0].mxu0
      %487 = vdwg.mxu0
      %v488 = vmax.f32 %v458, 0.0
      %v489 = vmax.f32 %v461, 0.0
      %v490 = vmax.f32 %v466, 0.0
      %v491 = vmax.f32 %v469, 0.0
      %v492 = vmax.f32 %v474, 0.0
      %v493 = vmax.f32 %v477, 0.0
      %v494 = vmax.f32 %v482, 0.0
      %v495 = vmax.f32 %v485, 0.0
      %v496 = vpack.c.bf16 %v489, %v488
      %v497 = vpack.c.bf16 %v491, %v490
      %v498 = vpack.c.bf16 %v493, %v492
      %v499 = vpack.c.bf16 %v495, %v494
      %v500 = vld [vmem:[%s3] sm:$0xf]
      %v501 = vld [vmem:[%s3 + $0x4] sm:$0xf]
      %v504 = vunpack.c.l.b16 %v500
      %v505 = vunpack.c.l.b16 %v501
      %v506 = vpack.c.b16 %v505, %v504
      %vm507 = vcmask 523264
      %v509 = vsel %vm507, %v506, 0
      %511 = vmatprep.subr.bf16.mxu0 0
      %512 = vmatpush1.bf16.msra.mxu0 %v496
      %513 = vmatprep.subr.bf16.mxu0 0
      %514 = vmatpush1.bf16.msra.mxu0 %v497
      %515 = vmatprep.subr.bf16.mxu0 0
      %516 = vmatpush1.bf16.msra.mxu0 %v498
      %517 = vmatprep.subr.bf16.mxu0 0
      %518 = vmatpush1.bf16.msra.mxu0 %v499
      %519 = vmatprep.subr.bf16.mxu0 0
      %520 = vmatpush1.bf16.msra.mxu0 0
      %521 = vmatprep.subr.bf16.mxu0 0
      %522 = vmatpush1.bf16.msra.mxu0 0
      %523 = vmatprep.subr.bf16.mxu0 0
      %524 = vmatpush1.bf16.msra.mxu0 0
      %525 = vmatprep.subr.bf16.mxu0 0
      %526 = vmatpush1.bf16.msra.mxu0 0
      %527 = vmatprep.subr.bf16.mxu0 0
      %528 = vmatpush1.bf16.msra.mxu0 0
      %529 = vmatprep.subr.bf16.mxu0 0
      %530 = vmatpush1.bf16.msra.mxu0 0
      %531 = vmatprep.subr.bf16.mxu0 0
      %532 = vmatpush1.bf16.msra.mxu0 0
      %533 = vmatprep.subr.bf16.mxu0 0
      %534 = vmatpush1.bf16.msra.mxu0 0
      %535 = vmatprep.subr.bf16.mxu0 0
      %536 = vmatpush1.bf16.msra.mxu0 0
      %537 = vmatprep.subr.bf16.mxu0 0
      %538 = vmatpush1.bf16.msra.mxu0 0
      %539 = vmatprep.subr.bf16.mxu0 0
      %540 = vmatpush1.bf16.msra.mxu0 0
      %541 = vmatprep.subr.bf16.mxu0 0
      %542 = vmatpush1.bf16.msra.mxu0 0
      %543 = vmatprep.mubr.bf16.mxu0 0
      %544 = vmatmul.mubr.bf16.gmra.mrb[0].mxu0 %v509
      %v545 = vpop.f32.mrb[0].mxu0
      %v546 = vadd.f32 0.0, %v545
      %v547 = vpop.f32.mrb[0].mxu0
      %v548 = vpop.f32.mrb[0].mxu0
      %v549 = vadd.f32 0.0, %v548
      %v550 = vpop.f32.mrb[0].mxu0
      %551 = vdwg.mxu0
      %v552 = vpack.c.bf16 %v549, %v546
      %v553 = vld [vmem:[%s4] sm:$0xf]
      %v554 = vld [vmem:[%s4 + $0x4] sm:$0xf]
      %v555 = vld [vmem:[%s4 + $0x8] sm:$0xf]
      %v556 = vld [vmem:[%s4 + $0xc] sm:$0xf]
      %s557 = scalar_lea.vmem %s3, 8
      %v558 = vld [vmem:[%s557] sm:$0xf]
      %v559 = vld [vmem:[%s557 + $0x4] sm:$0xf]
      %v562 = vunpack.c.l.b16 %v558
      %v563 = vunpack.c.l.b16 %v559
      %v564 = vpack.c.b16 %v563, %v562
      %v566 = vsel %vm507, %v564, 0
      %568 = vmatprep.subr.bf16.mxu0 0
      %569 = vmatpush1.bf16.msra.mxu0 %v496
      %570 = vmatprep.subr.bf16.mxu0 0
      %571 = vmatpush1.bf16.msra.mxu0 %v497
      %572 = vmatprep.subr.bf16.mxu0 0
      %573 = vmatpush1.bf16.msra.mxu0 %v498
      %574 = vmatprep.subr.bf16.mxu0 0
      %575 = vmatpush1.bf16.msra.mxu0 %v499
      %576 = vmatprep.subr.bf16.mxu0 0
      %577 = vmatpush1.bf16.msra.mxu0 0
      %578 = vmatprep.subr.bf16.mxu0 0
      %579 = vmatpush1.bf16.msra.mxu0 0
      %580 = vmatprep.subr.bf16.mxu0 0
      %581 = vmatpush1.bf16.msra.mxu0 0
      %582 = vmatprep.subr.bf16.mxu0 0
      %583 = vmatpush1.bf16.msra.mxu0 0
      %584 = vmatprep.subr.bf16.mxu0 0
      %585 = vmatpush1.bf16.msra.mxu0 0
      %586 = vmatprep.subr.bf16.mxu0 0
      %587 = vmatpush1.bf16.msra.mxu0 0
      %588 = vmatprep.subr.bf16.mxu0 0
      %589 = vmatpush1.bf16.msra.mxu0 0
      %590 = vmatprep.subr.bf16.mxu0 0
      %591 = vmatpush1.bf16.msra.mxu0 0
      %592 = vmatprep.subr.bf16.mxu0 0
      %593 = vmatpush1.bf16.msra.mxu0 0
      %594 = vmatprep.subr.bf16.mxu0 0
      %595 = vmatpush1.bf16.msra.mxu0 0
      %596 = vmatprep.subr.bf16.mxu0 0
      %597 = vmatpush1.bf16.msra.mxu0 0
      %598 = vmatprep.subr.bf16.mxu0 0
      %599 = vmatpush1.bf16.msra.mxu0 0
      %600 = vmatprep.mubr.bf16.mxu0 0
      %601 = vmatmul.mubr.bf16.gmra.mrb[0].mxu0 %v566
      %v602 = vpop.f32.mrb[0].mxu0
      %v603 = vadd.f32 0.0, %v602
      %v604 = vpop.f32.mrb[0].mxu0
      %v605 = vpop.f32.mrb[0].mxu0
      %v606 = vadd.f32 0.0, %v605
      %v607 = vpop.f32.mrb[0].mxu0
      %608 = vdwg.mxu0
      %v609 = vpack.c.bf16 %v606, %v603
      %s610 = scalar_lea.vmem %s4, 16
      %v611 = vld [vmem:[%s610] sm:$0xf]
      %v612 = vld [vmem:[%s610 + $0x4] sm:$0xf]
      %v613 = vld [vmem:[%s610 + $0x8] sm:$0xf]
      %v614 = vld [vmem:[%s610 + $0xc] sm:$0xf]
      %v619 = vunpack.c.l.b16 %v611
      %v620 = vunpack.c.l.b16 %v612
      %v621 = vunpack.c.l.b16 %v613
      %v622 = vunpack.c.l.b16 %v614
      %v623 = vpack.c.b16 %v620, %v619
      %v624 = vpack.c.b16 %v622, %v621
      %v628 = vsel %vm410, %v609, 0
      %630 = vmatprep.subr.bf16.mxu0 0
      %631 = vmatpush1.bf16.msra.mxu0 %v623
      %632 = vmatprep.subr.bf16.mxu0 0
      %633 = vmatpush1.bf16.msra.mxu0 %v624
      %634 = vmatprep.subr.bf16.mxu0 0
      %635 = vmatpush1.bf16.msra.mxu0 0
      %636 = vmatprep.subr.bf16.mxu0 0
      %637 = vmatpush1.bf16.msra.mxu0 0
      %638 = vmatprep.subr.bf16.mxu0 0
      %639 = vmatpush1.bf16.msra.mxu0 0
      %640 = vmatprep.subr.bf16.mxu0 0
      %641 = vmatpush1.bf16.msra.mxu0 0
      %642 = vmatprep.subr.bf16.mxu0 0
      %643 = vmatpush1.bf16.msra.mxu0 0
      %644 = vmatprep.subr.bf16.mxu0 0
      %645 = vmatpush1.bf16.msra.mxu0 0
      %646 = vmatprep.subr.bf16.mxu0 0
      %647 = vmatpush1.bf16.msra.mxu0 0
      %648 = vmatprep.subr.bf16.mxu0 0
      %649 = vmatpush1.bf16.msra.mxu0 0
      %650 = vmatprep.subr.bf16.mxu0 0
      %651 = vmatpush1.bf16.msra.mxu0 0
      %652 = vmatprep.subr.bf16.mxu0 0
      %653 = vmatpush1.bf16.msra.mxu0 0
      %654 = vmatprep.subr.bf16.mxu0 0
      %655 = vmatpush1.bf16.msra.mxu0 0
      %656 = vmatprep.subr.bf16.mxu0 0
      %657 = vmatpush1.bf16.msra.mxu0 0
      %658 = vmatprep.subr.bf16.mxu0 0
      %659 = vmatpush1.bf16.msra.mxu0 0
      %660 = vmatprep.subr.bf16.mxu0 0
      %661 = vmatpush1.bf16.msra.mxu0 0
      %662 = vmatprep.mubr.bf16.mxu0 0
      %663 = vmatmul.mubr.bf16.gmra.mrb[0].mxu0 %v628
      %v664 = vpop.f32.mrb[0].mxu0
      %v665 = vadd.f32 0.0, %v664
      %v666 = vpop.f32.mrb[0].mxu0
      %v667 = vpop.f32.mrb[0].mxu0
      %v668 = vadd.f32 0.0, %v667
      %v669 = vpop.f32.mrb[0].mxu0
      %670 = vdwg.mxu0
      %v675 = vunpack.c.l.b16 %v553
      %v676 = vunpack.c.l.b16 %v554
      %v677 = vunpack.c.l.b16 %v555
      %v678 = vunpack.c.l.b16 %v556
      %v679 = vpack.c.b16 %v676, %v675
      %v680 = vpack.c.b16 %v678, %v677
      %v684 = vsel %vm410, %v552, 0
      %686 = vmatprep.subr.bf16.mxu0 0
      %687 = vmatpush1.bf16.msra.mxu0 %v679
      %688 = vmatprep.subr.bf16.mxu0 0
      %689 = vmatpush1.bf16.msra.mxu0 %v680
      %690 = vmatprep.subr.bf16.mxu0 0
      %691 = vmatpush1.bf16.msra.mxu0 0
      %692 = vmatprep.subr.bf16.mxu0 0
      %693 = vmatpush1.bf16.msra.mxu0 0
      %694 = vmatprep.subr.bf16.mxu0 0
      %695 = vmatpush1.bf16.msra.mxu0 0
      %696 = vmatprep.subr.bf16.mxu0 0
      %697 = vmatpush1.bf16.msra.mxu0 0
      %698 = vmatprep.subr.bf16.mxu0 0
      %699 = vmatpush1.bf16.msra.mxu0 0
      %700 = vmatprep.subr.bf16.mxu0 0
      %701 = vmatpush1.bf16.msra.mxu0 0
      %702 = vmatprep.subr.bf16.mxu0 0
      %703 = vmatpush1.bf16.msra.mxu0 0
      %704 = vmatprep.subr.bf16.mxu0 0
      %705 = vmatpush1.bf16.msra.mxu0 0
      %706 = vmatprep.subr.bf16.mxu0 0
      %707 = vmatpush1.bf16.msra.mxu0 0
      %708 = vmatprep.subr.bf16.mxu0 0
      %709 = vmatpush1.bf16.msra.mxu0 0
      %710 = vmatprep.subr.bf16.mxu0 0
      %711 = vmatpush1.bf16.msra.mxu0 0
      %712 = vmatprep.subr.bf16.mxu0 0
      %713 = vmatpush1.bf16.msra.mxu0 0
      %714 = vmatprep.subr.bf16.mxu0 0
      %715 = vmatpush1.bf16.msra.mxu0 0
      %716 = vmatprep.subr.bf16.mxu0 0
      %717 = vmatpush1.bf16.msra.mxu0 0
      %718 = vmatprep.mubr.bf16.mxu0 0
      %719 = vmatmul.mubr.bf16.gmra.mrb[0].mxu0 %v684
      %v720 = vpop.f32.mrb[0].mxu0
      %v721 = vadd.f32 %v665, %v720
      %v722 = vpop.f32.mrb[0].mxu0
      %v723 = vpop.f32.mrb[0].mxu0
      %v724 = vadd.f32 %v668, %v723
      %v725 = vpop.f32.mrb[0].mxu0
      %726 = vdwg.mxu0
      %s727 = scalar_lea.vmem %s3, 16
      %v728 = vld [vmem:[%s727] sm:$0xf]
      %v729 = vld [vmem:[%s727 + $0x4] sm:$0xf]
      %v732 = vunpack.c.l.b16 %v728
      %v733 = vunpack.c.l.b16 %v729
      %v734 = vpack.c.b16 %v733, %v732
      %v736 = vsel %vm507, %v734, 0
      %738 = vmatprep.subr.bf16.mxu0 0
      %739 = vmatpush1.bf16.msra.mxu0 %v496
      %740 = vmatprep.subr.bf16.mxu0 0
      %741 = vmatpush1.bf16.msra.mxu0 %v497
      %742 = vmatprep.subr.bf16.mxu0 0
      %743 = vmatpush1.bf16.msra.mxu0 %v498
      %744 = vmatprep.subr.bf16.mxu0 0
      %745 = vmatpush1.bf16.msra.mxu0 %v499
      %746 = vmatprep.subr.bf16.mxu0 0
      %747 = vmatpush1.bf16.msra.mxu0 0
      %748 = vmatprep.subr.bf16.mxu0 0
      %749 = vmatpush1.bf16.msra.mxu0 0
      %750 = vmatprep.subr.bf16.mxu0 0
      %751 = vmatpush1.bf16.msra.mxu0 0
      %752 = vmatprep.subr.bf16.mxu0 0
      %753 = vmatpush1.bf16.msra.mxu0 0
      %754 = vmatprep.subr.bf16.mxu0 0
      %755 = vmatpush1.bf16.msra.mxu0 0
      %756 = vmatprep.subr.bf16.mxu0 0
      %757 = vmatpush1.bf16.msra.mxu0 0
      %758 = vmatprep.subr.bf16.mxu0 0
      %759 = vmatpush1.bf16.msra.mxu0 0
      %760 = vmatprep.subr.bf16.mxu0 0
      %761 = vmatpush1.bf16.msra.mxu0 0
      %762 = vmatprep.subr.bf16.mxu0 0
      %763 = vmatpush1.bf16.msra.mxu0 0
      %764 = vmatprep.subr.bf16.mxu0 0
      %765 = vmatpush1.bf16.msra.mxu0 0
      %766 = vmatprep.subr.bf16.mxu0 0
      %767 = vmatpush1.bf16.msra.mxu0 0
      %768 = vmatprep.subr.bf16.mxu0 0
      %769 = vmatpush1.bf16.msra.mxu0 0
      %770 = vmatprep.mubr.bf16.mxu0 0
      %771 = vmatmul.mubr.bf16.gmra.mrb[0].mxu0 %v736
      %v772 = vpop.f32.mrb[0].mxu0
      %v773 = vadd.f32 0.0, %v772
      %v774 = vpop.f32.mrb[0].mxu0
      %v775 = vpop.f32.mrb[0].mxu0
      %v776 = vadd.f32 0.0, %v775
      %v777 = vpop.f32.mrb[0].mxu0
      %778 = vdwg.mxu0
      %v779 = vpack.c.bf16 %v776, %v773
      %s780 = scalar_lea.vmem %s4, 32
      %v781 = vld [vmem:[%s780] sm:$0xf]
      %v782 = vld [vmem:[%s780 + $0x4] sm:$0xf]
      %v783 = vld [vmem:[%s780 + $0x8] sm:$0xf]
      %v784 = vld [vmem:[%s780 + $0xc] sm:$0xf]
      %v789 = vunpack.c.l.b16 %v781
      %v790 = vunpack.c.l.b16 %v782
      %v791 = vunpack.c.l.b16 %v783
      %v792 = vunpack.c.l.b16 %v784
      %v793 = vpack.c.b16 %v790, %v789
      %v794 = vpack.c.b16 %v792, %v791
      %v798 = vsel %vm410, %v779, 0
      %800 = vmatprep.subr.bf16.mxu0 0
      %801 = vmatpush1.bf16.msra.mxu0 %v793
      %802 = vmatprep.subr.bf16.mxu0 0
      %803 = vmatpush1.bf16.msra.mxu0 %v794
      %804 = vmatprep.subr.bf16.mxu0 0
      %805 = vmatpush1.bf16.msra.mxu0 0
      %806 = vmatprep.subr.bf16.mxu0 0
      %807 = vmatpush1.bf16.msra.mxu0 0
      %808 = vmatprep.subr.bf16.mxu0 0
      %809 = vmatpush1.bf16.msra.mxu0 0
      %810 = vmatprep.subr.bf16.mxu0 0
      %811 = vmatpush1.bf16.msra.mxu0 0
      %812 = vmatprep.subr.bf16.mxu0 0
      %813 = vmatpush1.bf16.msra.mxu0 0
      %814 = vmatprep.subr.bf16.mxu0 0
      %815 = vmatpush1.bf16.msra.mxu0 0
      %816 = vmatprep.subr.bf16.mxu0 0
      %817 = vmatpush1.bf16.msra.mxu0 0
      %818 = vmatprep.subr.bf16.mxu0 0
      %819 = vmatpush1.bf16.msra.mxu0 0
      %820 = vmatprep.subr.bf16.mxu0 0
      %821 = vmatpush1.bf16.msra.mxu0 0
      %822 = vmatprep.subr.bf16.mxu0 0
      %823 = vmatpush1.bf16.msra.mxu0 0
      %824 = vmatprep.subr.bf16.mxu0 0
      %825 = vmatpush1.bf16.msra.mxu0 0
      %826 = vmatprep.subr.bf16.mxu0 0
      %827 = vmatpush1.bf16.msra.mxu0 0
      %828 = vmatprep.subr.bf16.mxu0 0
      %829 = vmatpush1.bf16.msra.mxu0 0
      %830 = vmatprep.subr.bf16.mxu0 0
      %831 = vmatpush1.bf16.msra.mxu0 0
      %832 = vmatprep.mubr.bf16.mxu0 0
      %833 = vmatmul.mubr.bf16.gmra.mrb[0].mxu0 %v798
      %v834 = vpop.f32.mrb[0].mxu0
      %v835 = vadd.f32 0.0, %v834
      %v836 = vpop.f32.mrb[0].mxu0
      %v837 = vpop.f32.mrb[0].mxu0
      %v838 = vadd.f32 0.0, %v837
      %v839 = vpop.f32.mrb[0].mxu0
      %840 = vdwg.mxu0
      %v841 = vadd.f32 %v721, %v835
      %v842 = vadd.f32 %v724, %v838
      %s843 = scalar_lea.vmem %s3, 24
      %v844 = vld [vmem:[%s843] sm:$0xf]
      %v845 = vld [vmem:[%s843 + $0x4] sm:$0xf]
      %v848 = vunpack.c.l.b16 %v844
      %v849 = vunpack.c.l.b16 %v845
      %v850 = vpack.c.b16 %v849, %v848
      %v852 = vsel %vm507, %v850, 0
      %854 = vmatprep.subr.bf16.mxu0 0
      %855 = vmatpush1.bf16.msra.mxu0 %v496
      %856 = vmatprep.subr.bf16.mxu0 0
      %857 = vmatpush1.bf16.msra.mxu0 %v497
      %858 = vmatprep.subr.bf16.mxu0 0
      %859 = vmatpush1.bf16.msra.mxu0 %v498
      %860 = vmatprep.subr.bf16.mxu0 0
      %861 = vmatpush1.bf16.msra.mxu0 %v499
      %862 = vmatprep.subr.bf16.mxu0 0
      %863 = vmatpush1.bf16.msra.mxu0 0
      %864 = vmatprep.subr.bf16.mxu0 0
      %865 = vmatpush1.bf16.msra.mxu0 0
      %866 = vmatprep.subr.bf16.mxu0 0
      %867 = vmatpush1.bf16.msra.mxu0 0
      %868 = vmatprep.subr.bf16.mxu0 0
      %869 = vmatpush1.bf16.msra.mxu0 0
      %870 = vmatprep.subr.bf16.mxu0 0
      %871 = vmatpush1.bf16.msra.mxu0 0
      %872 = vmatprep.subr.bf16.mxu0 0
      %873 = vmatpush1.bf16.msra.mxu0 0
      %874 = vmatprep.subr.bf16.mxu0 0
      %875 = vmatpush1.bf16.msra.mxu0 0
      %876 = vmatprep.subr.bf16.mxu0 0
      %877 = vmatpush1.bf16.msra.mxu0 0
      %878 = vmatprep.subr.bf16.mxu0 0
      %879 = vmatpush1.bf16.msra.mxu0 0
      %880 = vmatprep.subr.bf16.mxu0 0
      %881 = vmatpush1.bf16.msra.mxu0 0
      %882 = vmatprep.subr.bf16.mxu0 0
      %883 = vmatpush1.bf16.msra.mxu0 0
      %884 = vmatprep.subr.bf16.mxu0 0
      %885 = vmatpush1.bf16.msra.mxu0 0
      %886 = vmatprep.mubr.bf16.mxu0 0
      %887 = vmatmul.mubr.bf16.gmra.mrb[0].mxu0 %v852
      %v888 = vpop.f32.mrb[0].mxu0
      %v889 = vadd.f32 0.0, %v888
      %v890 = vpop.f32.mrb[0].mxu0
      %v891 = vpop.f32.mrb[0].mxu0
      %v892 = vadd.f32 0.0, %v891
      %v893 = vpop.f32.mrb[0].mxu0
      %894 = vdwg.mxu0
      %v895 = vpack.c.bf16 %v892, %v889
      %s896 = scalar_lea.vmem %s4, 48
      %v897 = vld [vmem:[%s896] sm:$0xf]
      %v898 = vld [vmem:[%s896 + $0x4] sm:$0xf]
      %v899 = vld [vmem:[%s896 + $0x8] sm:$0xf]
      %v900 = vld [vmem:[%s896 + $0xc] sm:$0xf]
      %v905 = vunpack.c.l.b16 %v897
      %v906 = vunpack.c.l.b16 %v898
      %v907 = vunpack.c.l.b16 %v899
      %v908 = vunpack.c.l.b16 %v900
      %v909 = vpack.c.b16 %v906, %v905
      %v910 = vpack.c.b16 %v908, %v907
      %v914 = vsel %vm410, %v895, 0
      %916 = vmatprep.subr.bf16.mxu0 0
      %917 = vmatpush1.bf16.msra.mxu0 %v909
      %918 = vmatprep.subr.bf16.mxu0 0
      %919 = vmatpush1.bf16.msra.mxu0 %v910
      %920 = vmatprep.subr.bf16.mxu0 0
      %921 = vmatpush1.bf16.msra.mxu0 0
      %922 = vmatprep.subr.bf16.mxu0 0
      %923 = vmatpush1.bf16.msra.mxu0 0
      %924 = vmatprep.subr.bf16.mxu0 0
      %925 = vmatpush1.bf16.msra.mxu0 0
      %926 = vmatprep.subr.bf16.mxu0 0
      %927 = vmatpush1.bf16.msra.mxu0 0
      %928 = vmatprep.subr.bf16.mxu0 0
      %929 = vmatpush1.bf16.msra.mxu0 0
      %930 = vmatprep.subr.bf16.mxu0 0
      %931 = vmatpush1.bf16.msra.mxu0 0
      %932 = vmatprep.subr.bf16.mxu0 0
      %933 = vmatpush1.bf16.msra.mxu0 0
      %934 = vmatprep.subr.bf16.mxu0 0
      %935 = vmatpush1.bf16.msra.mxu0 0
      %936 = vmatprep.subr.bf16.mxu0 0
      %937 = vmatpush1.bf16.msra.mxu0 0
      %938 = vmatprep.subr.bf16.mxu0 0
      %939 = vmatpush1.bf16.msra.mxu0 0
      %940 = vmatprep.subr.bf16.mxu0 0
      %941 = vmatpush1.bf16.msra.mxu0 0
      %942 = vmatprep.subr.bf16.mxu0 0
      %943 = vmatpush1.bf16.msra.mxu0 0
      %944 = vmatprep.subr.bf16.mxu0 0
      %945 = vmatpush1.bf16.msra.mxu0 0
      %946 = vmatprep.subr.bf16.mxu0 0
      %947 = vmatpush1.bf16.msra.mxu0 0
      %948 = vmatprep.mubr.bf16.mxu0 0
      %949 = vmatmul.mubr.bf16.gmra.mrb[0].mxu0 %v914
      %v950 = vpop.f32.mrb[0].mxu0
      %v951 = vadd.f32 0.0, %v950
      %v952 = vpop.f32.mrb[0].mxu0
      %v953 = vpop.f32.mrb[0].mxu0
      %v954 = vadd.f32 0.0, %v953
      %v955 = vpop.f32.mrb[0].mxu0
      %956 = vdwg.mxu0
      %v957 = vadd.f32 %v841, %v951
      %v958 = vadd.f32 %v842, %v954
      %s959 = scalar_lea.vmem %s3, 32
      %v960 = vld [vmem:[%s959] sm:$0xf]
      %v961 = vld [vmem:[%s959 + $0x4] sm:$0xf]
      %v964 = vunpack.c.l.b16 %v960
      %v965 = vunpack.c.l.b16 %v961
      %v966 = vpack.c.b16 %v965, %v964
      %v968 = vsel %vm507, %v966, 0
      %970 = vmatprep.subr.bf16.mxu0 0
      %971 = vmatpush1.bf16.msra.mxu0 %v496
      %972 = vmatprep.subr.bf16.mxu0 0
      %973 = vmatpush1.bf16.msra.mxu0 %v497
      %974 = vmatprep.subr.bf16.mxu0 0
      %975 = vmatpush1.bf16.msra.mxu0 %v498
      %976 = vmatprep.subr.bf16.mxu0 0
      %977 = vmatpush1.bf16.msra.mxu0 %v499
      %978 = vmatprep.subr.bf16.mxu0 0
      %979 = vmatpush1.bf16.msra.mxu0 0
      %980 = vmatprep.subr.bf16.mxu0 0
      %981 = vmatpush1.bf16.msra.mxu0 0
      %982 = vmatprep.subr.bf16.mxu0 0
      %983 = vmatpush1.bf16.msra.mxu0 0
      %984 = vmatprep.subr.bf16.mxu0 0
      %985 = vmatpush1.bf16.msra.mxu0 0
      %986 = vmatprep.subr.bf16.mxu0 0
      %987 = vmatpush1.bf16.msra.mxu0 0
      %988 = vmatprep.subr.bf16.mxu0 0
      %989 = vmatpush1.bf16.msra.mxu0 0
      %990 = vmatprep.subr.bf16.mxu0 0
      %991 = vmatpush1.bf16.msra.mxu0 0
      %992 = vmatprep.subr.bf16.mxu0 0
      %993 = vmatpush1.bf16.msra.mxu0 0
      %994 = vmatprep.subr.bf16.mxu0 0
      %995 = vmatpush1.bf16.msra.mxu0 0
      %996 = vmatprep.subr.bf16.mxu0 0
      %997 = vmatpush1.bf16.msra.mxu0 0
      %998 = vmatprep.subr.bf16.mxu0 0
      %999 = vmatpush1.bf16.msra.mxu0 0
      %1000 = vmatprep.subr.bf16.mxu0 0
      %1001 = vmatpush1.bf16.msra.mxu0 0
      %1002 = vmatprep.mubr.bf16.mxu0 0
      %1003 = vmatmul.mubr.bf16.gmra.mrb[0].mxu0 %v968
      %v1004 = vpop.f32.mrb[0].mxu0
      %v1005 = vadd.f32 0.0, %v1004
      %v1006 = vpop.f32.mrb[0].mxu0
      %v1007 = vpop.f32.mrb[0].mxu0
      %v1008 = vadd.f32 0.0, %v1007
      %v1009 = vpop.f32.mrb[0].mxu0
      %1010 = vdwg.mxu0
      %v1011 = vpack.c.bf16 %v1008, %v1005
      %s1012 = scalar_lea.vmem %s4, 64
      %v1013 = vld [vmem:[%s1012] sm:$0xf]
      %v1014 = vld [vmem:[%s1012 + $0x4] sm:$0xf]
      %v1015 = vld [vmem:[%s1012 + $0x8] sm:$0xf]
      %v1016 = vld [vmem:[%s1012 + $0xc] sm:$0xf]
      %v1021 = vunpack.c.l.b16 %v1013
      %v1022 = vunpack.c.l.b16 %v1014
      %v1023 = vunpack.c.l.b16 %v1015
      %v1024 = vunpack.c.l.b16 %v1016
      %v1025 = vpack.c.b16 %v1022, %v1021
      %v1026 = vpack.c.b16 %v1024, %v1023
      %v1030 = vsel %vm410, %v1011, 0
      %1032 = vmatprep.subr.bf16.mxu0 0
      %1033 = vmatpush1.bf16.msra.mxu0 %v1025
      %1034 = vmatprep.subr.bf16.mxu0 0
      %1035 = vmatpush1.bf16.msra.mxu0 %v1026
      %1036 = vmatprep.subr.bf16.mxu0 0
      %1037 = vmatpush1.bf16.msra.mxu0 0
      %1038 = vmatprep.subr.bf16.mxu0 0
      %1039 = vmatpush1.bf16.msra.mxu0 0
      %1040 = vmatprep.subr.bf16.mxu0 0
      %1041 = vmatpush1.bf16.msra.mxu0 0
      %1042 = vmatprep.subr.bf16.mxu0 0
      %1043 = vmatpush1.bf16.msra.mxu0 0
      %1044 = vmatprep.subr.bf16.mxu0 0
      %1045 = vmatpush1.bf16.msra.mxu0 0
      %1046 = vmatprep.subr.bf16.mxu0 0
      %1047 = vmatpush1.bf16.msra.mxu0 0
      %1048 = vmatprep.subr.bf16.mxu0 0
      %1049 = vmatpush1.bf16.msra.mxu0 0
      %1050 = vmatprep.subr.bf16.mxu0 0
      %1051 = vmatpush1.bf16.msra.mxu0 0
      %1052 = vmatprep.subr.bf16.mxu0 0
      %1053 = vmatpush1.bf16.msra.mxu0 0
      %1054 = vmatprep.subr.bf16.mxu0 0
      %1055 = vmatpush1.bf16.msra.mxu0 0
      %1056 = vmatprep.subr.bf16.mxu0 0
      %1057 = vmatpush1.bf16.msra.mxu0 0
      %1058 = vmatprep.subr.bf16.mxu0 0
      %1059 = vmatpush1.bf16.msra.mxu0 0
      %1060 = vmatprep.subr.bf16.mxu0 0
      %1061 = vmatpush1.bf16.msra.mxu0 0
      %1062 = vmatprep.subr.bf16.mxu0 0
      %1063 = vmatpush1.bf16.msra.mxu0 0
      %1064 = vmatprep.mubr.bf16.mxu0 0
      %1065 = vmatmul.mubr.bf16.gmra.mrb[0].mxu0 %v1030
      %v1066 = vpop.f32.mrb[0].mxu0
      %v1067 = vadd.f32 0.0, %v1066
      %v1068 = vpop.f32.mrb[0].mxu0
      %v1069 = vpop.f32.mrb[0].mxu0
      %v1070 = vadd.f32 0.0, %v1069
      %v1071 = vpop.f32.mrb[0].mxu0
      %1072 = vdwg.mxu0
      %v1073 = vadd.f32 %v957, %v1067
      %v1074 = vadd.f32 %v958, %v1070
      %s1075 = scalar_lea.vmem %s3, 40
      %v1076 = vld [vmem:[%s1075] sm:$0xf]
      %v1077 = vld [vmem:[%s1075 + $0x4] sm:$0xf]
      %v1080 = vunpack.c.l.b16 %v1076
      %v1081 = vunpack.c.l.b16 %v1077
      %v1082 = vpack.c.b16 %v1081, %v1080
      %v1084 = vsel %vm507, %v1082, 0
      %1086 = vmatprep.subr.bf16.mxu0 0
      %1087 = vmatpush1.bf16.msra.mxu0 %v496
      %1088 = vmatprep.subr.bf16.mxu0 0
      %1089 = vmatpush1.bf16.msra.mxu0 %v497
      %1090 = vmatprep.subr.bf16.mxu0 0
      %1091 = vmatpush1.bf16.msra.mxu0 %v498
      %1092 = vmatprep.subr.bf16.mxu0 0
      %1093 = vmatpush1.bf16.msra.mxu0 %v499
      %1094 = vmatprep.subr.bf16.mxu0 0
      %1095 = vmatpush1.bf16.msra.mxu0 0
      %1096 = vmatprep.subr.bf16.mxu0 0
      %1097 = vmatpush1.bf16.msra.mxu0 0
      %1098 = vmatprep.subr.bf16.mxu0 0
      %1099 = vmatpush1.bf16.msra.mxu0 0
      %1100 = vmatprep.subr.bf16.mxu0 0
      %1101 = vmatpush1.bf16.msra.mxu0 0
      %1102 = vmatprep.subr.bf16.mxu0 0
      %1103 = vmatpush1.bf16.msra.mxu0 0
      %1104 = vmatprep.subr.bf16.mxu0 0
      %1105 = vmatpush1.bf16.msra.mxu0 0
      %1106 = vmatprep.subr.bf16.mxu0 0
      %1107 = vmatpush1.bf16.msra.mxu0 0
      %1108 = vmatprep.subr.bf16.mxu0 0
      %1109 = vmatpush1.bf16.msra.mxu0 0
      %1110 = vmatprep.subr.bf16.mxu0 0
      %1111 = vmatpush1.bf16.msra.mxu0 0
      %1112 = vmatprep.subr.bf16.mxu0 0
      %1113 = vmatpush1.bf16.msra.mxu0 0
      %1114 = vmatprep.subr.bf16.mxu0 0
      %1115 = vmatpush1.bf16.msra.mxu0 0
      %1116 = vmatprep.subr.bf16.mxu0 0
      %1117 = vmatpush1.bf16.msra.mxu0 0
      %1118 = vmatprep.mubr.bf16.mxu0 0
      %1119 = vmatmul.mubr.bf16.gmra.mrb[0].mxu0 %v1084
      %v1120 = vpop.f32.mrb[0].mxu0
      %v1121 = vadd.f32 0.0, %v1120
      %v1122 = vpop.f32.mrb[0].mxu0
      %v1123 = vpop.f32.mrb[0].mxu0
      %v1124 = vadd.f32 0.0, %v1123
      %v1125 = vpop.f32.mrb[0].mxu0
      %1126 = vdwg.mxu0
      %v1127 = vpack.c.bf16 %v1124, %v1121
      %s1128 = scalar_lea.vmem %s4, 80
      %v1129 = vld [vmem:[%s1128] sm:$0xf]
      %v1130 = vld [vmem:[%s1128 + $0x4] sm:$0xf]
      %v1131 = vld [vmem:[%s1128 + $0x8] sm:$0xf]
      %v1132 = vld [vmem:[%s1128 + $0xc] sm:$0xf]
      %v1137 = vunpack.c.l.b16 %v1129
      %v1138 = vunpack.c.l.b16 %v1130
      %v1139 = vunpack.c.l.b16 %v1131
      %v1140 = vunpack.c.l.b16 %v1132
      %v1141 = vpack.c.b16 %v1138, %v1137
      %v1142 = vpack.c.b16 %v1140, %v1139
      %v1146 = vsel %vm410, %v1127, 0
      %1148 = vmatprep.subr.bf16.mxu0 0
      %1149 = vmatpush1.bf16.msra.mxu0 %v1141
      %1150 = vmatprep.subr.bf16.mxu0 0
      %1151 = vmatpush1.bf16.msra.mxu0 %v1142
      %1152 = vmatprep.subr.bf16.mxu0 0
      %1153 = vmatpush1.bf16.msra.mxu0 0
      %1154 = vmatprep.subr.bf16.mxu0 0
      %1155 = vmatpush1.bf16.msra.mxu0 0
      %1156 = vmatprep.subr.bf16.mxu0 0
      %1157 = vmatpush1.bf16.msra.mxu0 0
      %1158 = vmatprep.subr.bf16.mxu0 0
      %1159 = vmatpush1.bf16.msra.mxu0 0
      %1160 = vmatprep.subr.bf16.mxu0 0
      %1161 = vmatpush1.bf16.msra.mxu0 0
      %1162 = vmatprep.subr.bf16.mxu0 0
      %1163 = vmatpush1.bf16.msra.mxu0 0
      %1164 = vmatprep.subr.bf16.mxu0 0
      %1165 = vmatpush1.bf16.msra.mxu0 0
      %1166 = vmatprep.subr.bf16.mxu0 0
      %1167 = vmatpush1.bf16.msra.mxu0 0
      %1168 = vmatprep.subr.bf16.mxu0 0
      %1169 = vmatpush1.bf16.msra.mxu0 0
      %1170 = vmatprep.subr.bf16.mxu0 0
      %1171 = vmatpush1.bf16.msra.mxu0 0
      %1172 = vmatprep.subr.bf16.mxu0 0
      %1173 = vmatpush1.bf16.msra.mxu0 0
      %1174 = vmatprep.subr.bf16.mxu0 0
      %1175 = vmatpush1.bf16.msra.mxu0 0
      %1176 = vmatprep.subr.bf16.mxu0 0
      %1177 = vmatpush1.bf16.msra.mxu0 0
      %1178 = vmatprep.subr.bf16.mxu0 0
      %1179 = vmatpush1.bf16.msra.mxu0 0
      %1180 = vmatprep.mubr.bf16.mxu0 0
      %1181 = vmatmul.mubr.bf16.gmra.mrb[0].mxu0 %v1146
      %v1182 = vpop.f32.mrb[0].mxu0
      %v1183 = vadd.f32 0.0, %v1182
      %v1184 = vpop.f32.mrb[0].mxu0
      %v1185 = vpop.f32.mrb[0].mxu0
      %v1186 = vadd.f32 0.0, %v1185
      %v1187 = vpop.f32.mrb[0].mxu0
      %1188 = vdwg.mxu0
      %v1189 = vadd.f32 %v1073, %v1183
      %v1190 = vadd.f32 %v1074, %v1186
      %s1191 = scalar_lea.vmem %s3, 48
      %v1192 = vld [vmem:[%s1191] sm:$0xf]
      %v1193 = vld [vmem:[%s1191 + $0x4] sm:$0xf]
      %v1196 = vunpack.c.l.b16 %v1192
      %v1197 = vunpack.c.l.b16 %v1193
      %v1198 = vpack.c.b16 %v1197, %v1196
      %v1200 = vsel %vm507, %v1198, 0
      %1202 = vmatprep.subr.bf16.mxu0 0
      %1203 = vmatpush1.bf16.msra.mxu0 %v496
      %1204 = vmatprep.subr.bf16.mxu0 0
      %1205 = vmatpush1.bf16.msra.mxu0 %v497
      %1206 = vmatprep.subr.bf16.mxu0 0
      %1207 = vmatpush1.bf16.msra.mxu0 %v498
      %1208 = vmatprep.subr.bf16.mxu0 0
      %1209 = vmatpush1.bf16.msra.mxu0 %v499
      %1210 = vmatprep.subr.bf16.mxu0 0
      %1211 = vmatpush1.bf16.msra.mxu0 0
      %1212 = vmatprep.subr.bf16.mxu0 0
      %1213 = vmatpush1.bf16.msra.mxu0 0
      %1214 = vmatprep.subr.bf16.mxu0 0
      %1215 = vmatpush1.bf16.msra.mxu0 0
      %1216 = vmatprep.subr.bf16.mxu0 0
      %1217 = vmatpush1.bf16.msra.mxu0 0
      %1218 = vmatprep.subr.bf16.mxu0 0
      %1219 = vmatpush1.bf16.msra.mxu0 0
      %1220 = vmatprep.subr.bf16.mxu0 0
      %1221 = vmatpush1.bf16.msra.mxu0 0
      %1222 = vmatprep.subr.bf16.mxu0 0
      %1223 = vmatpush1.bf16.msra.mxu0 0
      %1224 = vmatprep.subr.bf16.mxu0 0
      %1225 = vmatpush1.bf16.msra.mxu0 0
      %1226 = vmatprep.subr.bf16.mxu0 0
      %1227 = vmatpush1.bf16.msra.mxu0 0
      %1228 = vmatprep.subr.bf16.mxu0 0
      %1229 = vmatpush1.bf16.msra.mxu0 0
      %1230 = vmatprep.subr.bf16.mxu0 0
      %1231 = vmatpush1.bf16.msra.mxu0 0
      %1232 = vmatprep.subr.bf16.mxu0 0
      %1233 = vmatpush1.bf16.msra.mxu0 0
      %1234 = vmatprep.mubr.bf16.mxu0 0
      %1235 = vmatmul.mubr.bf16.gmra.mrb[0].mxu0 %v1200
      %v1236 = vpop.f32.mrb[0].mxu0
      %v1237 = vadd.f32 0.0, %v1236
      %v1238 = vpop.f32.mrb[0].mxu0
      %v1239 = vpop.f32.mrb[0].mxu0
      %v1240 = vadd.f32 0.0, %v1239
      %v1241 = vpop.f32.mrb[0].mxu0
      %1242 = vdwg.mxu0
      %v1243 = vpack.c.bf16 %v1240, %v1237
      %s1244 = scalar_lea.vmem %s4, 96
      %v1245 = vld [vmem:[%s1244] sm:$0xf]
      %v1246 = vld [vmem:[%s1244 + $0x4] sm:$0xf]
      %v1247 = vld [vmem:[%s1244 + $0x8] sm:$0xf]
      %v1248 = vld [vmem:[%s1244 + $0xc] sm:$0xf]
      %v1253 = vunpack.c.l.b16 %v1245
      %v1254 = vunpack.c.l.b16 %v1246
      %v1255 = vunpack.c.l.b16 %v1247
      %v1256 = vunpack.c.l.b16 %v1248
      %v1257 = vpack.c.b16 %v1254, %v1253
      %v1258 = vpack.c.b16 %v1256, %v1255
      %v1262 = vsel %vm410, %v1243, 0
      %1264 = vmatprep.subr.bf16.mxu0 0
      %1265 = vmatpush1.bf16.msra.mxu0 %v1257
      %1266 = vmatprep.subr.bf16.mxu0 0
      %1267 = vmatpush1.bf16.msra.mxu0 %v1258
      %1268 = vmatprep.subr.bf16.mxu0 0
      %1269 = vmatpush1.bf16.msra.mxu0 0
      %1270 = vmatprep.subr.bf16.mxu0 0
      %1271 = vmatpush1.bf16.msra.mxu0 0
      %1272 = vmatprep.subr.bf16.mxu0 0
      %1273 = vmatpush1.bf16.msra.mxu0 0
      %1274 = vmatprep.subr.bf16.mxu0 0
      %1275 = vmatpush1.bf16.msra.mxu0 0
      %1276 = vmatprep.subr.bf16.mxu0 0
      %1277 = vmatpush1.bf16.msra.mxu0 0
      %1278 = vmatprep.subr.bf16.mxu0 0
      %1279 = vmatpush1.bf16.msra.mxu0 0
      %1280 = vmatprep.subr.bf16.mxu0 0
      %1281 = vmatpush1.bf16.msra.mxu0 0
      %1282 = vmatprep.subr.bf16.mxu0 0
      %1283 = vmatpush1.bf16.msra.mxu0 0
      %1284 = vmatprep.subr.bf16.mxu0 0
      %1285 = vmatpush1.bf16.msra.mxu0 0
      %1286 = vmatprep.subr.bf16.mxu0 0
      %1287 = vmatpush1.bf16.msra.mxu0 0
      %1288 = vmatprep.subr.bf16.mxu0 0
      %1289 = vmatpush1.bf16.msra.mxu0 0
      %1290 = vmatprep.subr.bf16.mxu0 0
      %1291 = vmatpush1.bf16.msra.mxu0 0
      %1292 = vmatprep.subr.bf16.mxu0 0
      %1293 = vmatpush1.bf16.msra.mxu0 0
      %1294 = vmatprep.subr.bf16.mxu0 0
      %1295 = vmatpush1.bf16.msra.mxu0 0
      %1296 = vmatprep.mubr.bf16.mxu0 0
      %1297 = vmatmul.mubr.bf16.gmra.mrb[0].mxu0 %v1262
      %v1298 = vpop.f32.mrb[0].mxu0
      %v1299 = vadd.f32 0.0, %v1298
      %v1300 = vpop.f32.mrb[0].mxu0
      %v1301 = vpop.f32.mrb[0].mxu0
      %v1302 = vadd.f32 0.0, %v1301
      %v1303 = vpop.f32.mrb[0].mxu0
      %1304 = vdwg.mxu0
      %v1305 = vadd.f32 %v1189, %v1299
      %v1306 = vadd.f32 %v1190, %v1302
      %s1307 = scalar_lea.vmem %s3, 56
      %v1308 = vld [vmem:[%s1307] sm:$0xf]
      %v1309 = vld [vmem:[%s1307 + $0x4] sm:$0xf]
      %v1312 = vunpack.c.l.b16 %v1308
      %v1313 = vunpack.c.l.b16 %v1309
      %v1314 = vpack.c.b16 %v1313, %v1312
      %v1316 = vsel %vm507, %v1314, 0
      %1318 = vmatprep.subr.bf16.mxu0 0
      %1319 = vmatpush1.bf16.msra.mxu0 %v496
      %1320 = vmatprep.subr.bf16.mxu0 0
      %1321 = vmatpush1.bf16.msra.mxu0 %v497
      %1322 = vmatprep.subr.bf16.mxu0 0
      %1323 = vmatpush1.bf16.msra.mxu0 %v498
      %1324 = vmatprep.subr.bf16.mxu0 0
      %1325 = vmatpush1.bf16.msra.mxu0 %v499
      %1326 = vmatprep.subr.bf16.mxu0 0
      %1327 = vmatpush1.bf16.msra.mxu0 0
      %1328 = vmatprep.subr.bf16.mxu0 0
      %1329 = vmatpush1.bf16.msra.mxu0 0
      %1330 = vmatprep.subr.bf16.mxu0 0
      %1331 = vmatpush1.bf16.msra.mxu0 0
      %1332 = vmatprep.subr.bf16.mxu0 0
      %1333 = vmatpush1.bf16.msra.mxu0 0
      %1334 = vmatprep.subr.bf16.mxu0 0
      %1335 = vmatpush1.bf16.msra.mxu0 0
      %1336 = vmatprep.subr.bf16.mxu0 0
      %1337 = vmatpush1.bf16.msra.mxu0 0
      %1338 = vmatprep.subr.bf16.mxu0 0
      %1339 = vmatpush1.bf16.msra.mxu0 0
      %1340 = vmatprep.subr.bf16.mxu0 0
      %1341 = vmatpush1.bf16.msra.mxu0 0
      %1342 = vmatprep.subr.bf16.mxu0 0
      %1343 = vmatpush1.bf16.msra.mxu0 0
      %1344 = vmatprep.subr.bf16.mxu0 0
      %1345 = vmatpush1.bf16.msra.mxu0 0
      %1346 = vmatprep.subr.bf16.mxu0 0
      %1347 = vmatpush1.bf16.msra.mxu0 0
      %1348 = vmatprep.subr.bf16.mxu0 0
      %1349 = vmatpush1.bf16.msra.mxu0 0
      %1350 = vmatprep.mubr.bf16.mxu0 0
      %1351 = vmatmul.mubr.bf16.gmra.mrb[0].mxu0 %v1316
      %v1352 = vpop.f32.mrb[0].mxu0
      %v1353 = vadd.f32 0.0, %v1352
      %v1354 = vpop.f32.mrb[0].mxu0
      %v1355 = vpop.f32.mrb[0].mxu0
      %v1356 = vadd.f32 0.0, %v1355
      %v1357 = vpop.f32.mrb[0].mxu0
      %1358 = vdwg.mxu0
      %v1359 = vpack.c.bf16 %v1356, %v1353
      %s1360 = scalar_lea.vmem %s4, 112
      %v1361 = vld [vmem:[%s1360] sm:$0xf]
      %v1362 = vld [vmem:[%s1360 + $0x4] sm:$0xf]
      %v1363 = vld [vmem:[%s1360 + $0x8] sm:$0xf]
      %v1364 = vld [vmem:[%s1360 + $0xc] sm:$0xf]
      %v1369 = vunpack.c.l.b16 %v1361
      %v1370 = vunpack.c.l.b16 %v1362
      %v1371 = vunpack.c.l.b16 %v1363
      %v1372 = vunpack.c.l.b16 %v1364
      %v1373 = vpack.c.b16 %v1370, %v1369
      %v1374 = vpack.c.b16 %v1372, %v1371
      %v1378 = vsel %vm410, %v1359, 0
      %1380 = vmatprep.subr.bf16.mxu0 0
      %1381 = vmatpush1.bf16.msra.mxu0 %v1373
      %1382 = vmatprep.subr.bf16.mxu0 0
      %1383 = vmatpush1.bf16.msra.mxu0 %v1374
      %1384 = vmatprep.subr.bf16.mxu0 0
      %1385 = vmatpush1.bf16.msra.mxu0 0
      %1386 = vmatprep.subr.bf16.mxu0 0
      %1387 = vmatpush1.bf16.msra.mxu0 0
      %1388 = vmatprep.subr.bf16.mxu0 0
      %1389 = vmatpush1.bf16.msra.mxu0 0
      %1390 = vmatprep.subr.bf16.mxu0 0
      %1391 = vmatpush1.bf16.msra.mxu0 0
      %1392 = vmatprep.subr.bf16.mxu0 0
      %1393 = vmatpush1.bf16.msra.mxu0 0
      %1394 = vmatprep.subr.bf16.mxu0 0
      %1395 = vmatpush1.bf16.msra.mxu0 0
      %1396 = vmatprep.subr.bf16.mxu0 0
      %1397 = vmatpush1.bf16.msra.mxu0 0
      %1398 = vmatprep.subr.bf16.mxu0 0
      %1399 = vmatpush1.bf16.msra.mxu0 0
      %1400 = vmatprep.subr.bf16.mxu0 0
      %1401 = vmatpush1.bf16.msra.mxu0 0
      %1402 = vmatprep.subr.bf16.mxu0 0
      %1403 = vmatpush1.bf16.msra.mxu0 0
      %1404 = vmatprep.subr.bf16.mxu0 0
      %1405 = vmatpush1.bf16.msra.mxu0 0
      %1406 = vmatprep.subr.bf16.mxu0 0
      %1407 = vmatpush1.bf16.msra.mxu0 0
      %1408 = vmatprep.subr.bf16.mxu0 0
      %1409 = vmatpush1.bf16.msra.mxu0 0
      %1410 = vmatprep.subr.bf16.mxu0 0
      %1411 = vmatpush1.bf16.msra.mxu0 0
      %1412 = vmatprep.mubr.bf16.mxu0 0
      %1413 = vmatmul.mubr.bf16.gmra.mrb[0].mxu0 %v1378
      %v1414 = vpop.f32.mrb[0].mxu0
      %v1415 = vadd.f32 0.0, %v1414
      %v1416 = vpop.f32.mrb[0].mxu0
      %v1417 = vpop.f32.mrb[0].mxu0
      %v1418 = vadd.f32 0.0, %v1417
      %v1419 = vpop.f32.mrb[0].mxu0
      %1420 = vdwg.mxu0
      %v1421 = vadd.f32 %v1305, %v1415
      %v1422 = vadd.f32 %v1306, %v1418
      %s1423 = scalar_lea.vmem %s3, 64
      %v1424 = vld [vmem:[%s1423] sm:$0xf]
      %v1425 = vld [vmem:[%s1423 + $0x4] sm:$0xf]
      %v1428 = vunpack.c.l.b16 %v1424
      %v1429 = vunpack.c.l.b16 %v1425
      %v1430 = vpack.c.b16 %v1429, %v1428
      %v1432 = vsel %vm507, %v1430, 0
      %1434 = vmatprep.subr.bf16.mxu0 0
      %1435 = vmatpush1.bf16.msra.mxu0 %v496
      %1436 = vmatprep.subr.bf16.mxu0 0
      %1437 = vmatpush1.bf16.msra.mxu0 %v497
      %1438 = vmatprep.subr.bf16.mxu0 0
      %1439 = vmatpush1.bf16.msra.mxu0 %v498
      %1440 = vmatprep.subr.bf16.mxu0 0
      %1441 = vmatpush1.bf16.msra.mxu0 %v499
      %1442 = vmatprep.subr.bf16.mxu0 0
      %1443 = vmatpush1.bf16.msra.mxu0 0
      %1444 = vmatprep.subr.bf16.mxu0 0
      %1445 = vmatpush1.bf16.msra.mxu0 0
      %1446 = vmatprep.subr.bf16.mxu0 0
      %1447 = vmatpush1.bf16.msra.mxu0 0
      %1448 = vmatprep.subr.bf16.mxu0 0
      %1449 = vmatpush1.bf16.msra.mxu0 0
      %1450 = vmatprep.subr.bf16.mxu0 0
      %1451 = vmatpush1.bf16.msra.mxu0 0
      %1452 = vmatprep.subr.bf16.mxu0 0
      %1453 = vmatpush1.bf16.msra.mxu0 0
      %1454 = vmatprep.subr.bf16.mxu0 0
      %1455 = vmatpush1.bf16.msra.mxu0 0
      %1456 = vmatprep.subr.bf16.mxu0 0
      %1457 = vmatpush1.bf16.msra.mxu0 0
      %1458 = vmatprep.subr.bf16.mxu0 0
      %1459 = vmatpush1.bf16.msra.mxu0 0
      %1460 = vmatprep.subr.bf16.mxu0 0
      %1461 = vmatpush1.bf16.msra.mxu0 0
      %1462 = vmatprep.subr.bf16.mxu0 0
      %1463 = vmatpush1.bf16.msra.mxu0 0
      %1464 = vmatprep.subr.bf16.mxu0 0
      %1465 = vmatpush1.bf16.msra.mxu0 0
      %1466 = vmatprep.mubr.bf16.mxu0 0
      %1467 = vmatmul.mubr.bf16.gmra.mrb[0].mxu0 %v1432
      %v1468 = vpop.f32.mrb[0].mxu0
      %v1469 = vadd.f32 0.0, %v1468
      %v1470 = vpop.f32.mrb[0].mxu0
      %v1471 = vpop.f32.mrb[0].mxu0
      %v1472 = vadd.f32 0.0, %v1471
      %v1473 = vpop.f32.mrb[0].mxu0
      %1474 = vdwg.mxu0
      %v1475 = vpack.c.bf16 %v1472, %v1469
      %s1476 = scalar_lea.vmem %s4, 128
      %v1477 = vld [vmem:[%s1476] sm:$0xf]
      %v1478 = vld [vmem:[%s1476 + $0x4] sm:$0xf]
      %v1479 = vld [vmem:[%s1476 + $0x8] sm:$0xf]
      %v1480 = vld [vmem:[%s1476 + $0xc] sm:$0xf]
      %v1485 = vunpack.c.l.b16 %v1477
      %v1486 = vunpack.c.l.b16 %v1478
      %v1487 = vunpack.c.l.b16 %v1479
      %v1488 = vunpack.c.l.b16 %v1480
      %v1489 = vpack.c.b16 %v1486, %v1485
      %v1490 = vpack.c.b16 %v1488, %v1487
      %v1494 = vsel %vm410, %v1475, 0
      %1496 = vmatprep.subr.bf16.mxu0 0
      %1497 = vmatpush1.bf16.msra.mxu0 %v1489
      %1498 = vmatprep.subr.bf16.mxu0 0
      %1499 = vmatpush1.bf16.msra.mxu0 %v1490
      %1500 = vmatprep.subr.bf16.mxu0 0
      %1501 = vmatpush1.bf16.msra.mxu0 0
      %1502 = vmatprep.subr.bf16.mxu0 0
      %1503 = vmatpush1.bf16.msra.mxu0 0
      %1504 = vmatprep.subr.bf16.mxu0 0
      %1505 = vmatpush1.bf16.msra.mxu0 0
      %1506 = vmatprep.subr.bf16.mxu0 0
      %1507 = vmatpush1.bf16.msra.mxu0 0
      %1508 = vmatprep.subr.bf16.mxu0 0
      %1509 = vmatpush1.bf16.msra.mxu0 0
      %1510 = vmatprep.subr.bf16.mxu0 0
      %1511 = vmatpush1.bf16.msra.mxu0 0
      %1512 = vmatprep.subr.bf16.mxu0 0
      %1513 = vmatpush1.bf16.msra.mxu0 0
      %1514 = vmatprep.subr.bf16.mxu0 0
      %1515 = vmatpush1.bf16.msra.mxu0 0
      %1516 = vmatprep.subr.bf16.mxu0 0
      %1517 = vmatpush1.bf16.msra.mxu0 0
      %1518 = vmatprep.subr.bf16.mxu0 0
      %1519 = vmatpush1.bf16.msra.mxu0 0
      %1520 = vmatprep.subr.bf16.mxu0 0
      %1521 = vmatpush1.bf16.msra.mxu0 0
      %1522 = vmatprep.subr.bf16.mxu0 0
      %1523 = vmatpush1.bf16.msra.mxu0 0
      %1524 = vmatprep.subr.bf16.mxu0 0
      %1525 = vmatpush1.bf16.msra.mxu0 0
      %1526 = vmatprep.subr.bf16.mxu0 0
      %1527 = vmatpush1.bf16.msra.mxu0 0
      %1528 = vmatprep.mubr.bf16.mxu0 0
      %1529 = vmatmul.mubr.bf16.gmra.mrb[0].mxu0 %v1494
      %v1530 = vpop.f32.mrb[0].mxu0
      %v1531 = vadd.f32 0.0, %v1530
      %v1532 = vpop.f32.mrb[0].mxu0
      %v1533 = vpop.f32.mrb[0].mxu0
      %v1534 = vadd.f32 0.0, %v1533
      %v1535 = vpop.f32.mrb[0].mxu0
      %1536 = vdwg.mxu0
      %v1537 = vadd.f32 %v1421, %v1531
      %v1538 = vadd.f32 %v1422, %v1534
      %v1539 = vld [vmem:[%s5] sm:$0x1]
      %v1541 = vlaneseq
      %v1542 = vshrl.u32 %v1541, 7
      %v1543 = vsub.s32 0, %v1542
      %v1544 = vrot.slane %v1539, %v1543
      %v1546 = vadd.f32 %v1537, %v1544
      %v1547 = vadd.f32 %v1538, %v1544
      %v1548 = vmax.f32 %v1546, 0.0
      %v1549 = vmax.f32 %v1547, 0.0
      %v1550 = vlaneseq
      %vm1551 = vcmp.ge.s32.totalorder %v1550, 0
      %vm1552 = vcmp.lt.s32.totalorder %v1550, 64
      %vm1553 = vmand %vm1551, %vm1552
      %1554 = vst.msk [vmem:[#allocation2] sm:$0x1] %vm1553, %v1548
      %v1557 = vunpack.c.l.s4 1966171168
      %v1558 = vunpack.c.0.s8 %v1557
      %v1559 = vlaneseq
      %v1560 = vshrl.u32 %v1559, 7
      %v1561 = vsub.s32 %v1558, %v1560
      %v1562 = vrot.slane %v1548, %v1561
      %v1563 = vcombine.high %v1562, %v1562
      %v1565 = vunpack.c.l.s4 1966171168
      %v1566 = vunpack.c.0.s8 %v1565
      %v1567 = vlaneseq
      %v1568 = vshrl.u32 %v1567, 7
      %v1569 = vsub.s32 %v1566, %v1568
      %v1570 = vrot.slane %v1562, %v1569
      %v1572 = vunpack.c.l.s4 1966171168
      %v1573 = vunpack.c.0.s8 %v1572
      %v1574 = vlaneseq
      %v1575 = vshrl.u32 %v1574, 7
      %v1576 = vsub.s32 %v1573, %v1575
      %v1577 = vrot.slane %v1563, %v1576
      %1578 = vrot.lane.b32.xlu0 %v1577, 64
      %v1579 = vpop.permute.xlu0 %1578
      %vm1581 = vcmp.ge.s32.totalorder %v1550, 64
      %vm1582 = vcmp.lt.s32.totalorder %v1550, 128
      %vm1583 = vmand %vm1581, %vm1582
      %1584 = vst.msk [vmem:[#allocation2] sm:$0x1] %vm1583, %v1579
      %v1585 = vcombine.high %v1570, %v1570
      %1587 = vst.msk [vmem:[#allocation2 + $0x1] sm:$0x1] %vm1553, %v1585
      %v1588 = vcombine.high %v1577, %v1577
      %1589 = vrot.lane.b32.xlu0 %v1588, 64
      %v1590 = vpop.permute.xlu0 %1589
      %1592 = vst.msk [vmem:[#allocation2 + $0x1] sm:$0x1] %vm1583, %v1590
      %v1593 = vcombine.high %v1548, %v1548
      %v1595 = vunpack.c.l.s4 1966171168
      %v1596 = vunpack.c.0.s8 %v1595
      %v1597 = vlaneseq
      %v1598 = vshrl.u32 %v1597, 7
      %v1599 = vsub.s32 %v1596, %v1598
      %v1600 = vrot.slane %v1593, %v1599
      %v1602 = vunpack.c.l.s4 1966171168
      %v1603 = vunpack.c.0.s8 %v1602
      %v1604 = vlaneseq
      %v1605 = vshrl.u32 %v1604, 7
      %v1606 = vsub.s32 %v1603, %v1605
      %v1607 = vrot.slane %v1600, %v1606
      %1609 = vst.msk [vmem:[#allocation2 + $0x2] sm:$0x1] %vm1553, %v1607
      %v1610 = vcombine.high %v1600, %v1600
      %v1612 = vunpack.c.l.s4 1966171168
      %v1613 = vunpack.c.0.s8 %v1612
      %v1614 = vlaneseq
      %v1615 = vshrl.u32 %v1614, 7
      %v1616 = vsub.s32 %v1613, %v1615
      %v1617 = vrot.slane %v1610, %v1616
      %1618 = vrot.lane.b32.xlu0 %v1617, 64
      %v1619 = vpop.permute.xlu0 %1618
      %1621 = vst.msk [vmem:[#allocation2 + $0x2] sm:$0x1] %vm1583, %v1619
      %v1622 = vcombine.high %v1607, %v1607
      %1624 = vst.msk [vmem:[#allocation2 + $0x3] sm:$0x1] %vm1553, %v1622
      %v1625 = vcombine.high %v1617, %v1617
      %1626 = vrot.lane.b32.xlu0 %v1625, 64
      %v1627 = vpop.permute.xlu0 %1626
      %1629 = vst.msk [vmem:[#allocation2 + $0x3] sm:$0x1] %vm1583, %v1627
      %1630 = vst.msk [vmem:[#allocation2 + $0x4] sm:$0x1] %vm1553, %v1549
      %v1633 = vunpack.c.l.s4 1966171168
      %v1634 = vunpack.c.0.s8 %v1633
      %v1635 = vlaneseq
      %v1636 = vshrl.u32 %v1635, 7
      %v1637 = vsub.s32 %v1634, %v1636
      %v1638 = vrot.slane %v1549, %v1637
      %v1639 = vcombine.high %v1638, %v1638
      %v1641 = vunpack.c.l.s4 1966171168
      %v1642 = vunpack.c.0.s8 %v1641
      %v1643 = vlaneseq
      %v1644 = vshrl.u32 %v1643, 7
      %v1645 = vsub.s32 %v1642, %v1644
      %v1646 = vrot.slane %v1638, %v1645
      %v1648 = vunpack.c.l.s4 1966171168
      %v1649 = vunpack.c.0.s8 %v1648
      %v1650 = vlaneseq
      %v1651 = vshrl.u32 %v1650, 7
      %v1652 = vsub.s32 %v1649, %v1651
      %v1653 = vrot.slane %v1639, %v1652
      %1654 = vrot.lane.b32.xlu0 %v1653, 64
      %v1655 = vpop.permute.xlu0 %1654
      %1657 = vst.msk [vmem:[#allocation2 + $0x4] sm:$0x1] %vm1583, %v1655
      %v1658 = vcombine.high %v1646, %v1646
      %1660 = vst.msk [vmem:[#allocation2 + $0x5] sm:$0x1] %vm1553, %v1658
      %v1661 = vcombine.high %v1653, %v1653
      %1662 = vrot.lane.b32.xlu0 %v1661, 64
      %v1663 = vpop.permute.xlu0 %1662
      %1665 = vst.msk [vmem:[#allocation2 + $0x5] sm:$0x1] %vm1583, %v1663
      %v1666 = vcombine.high %v1549, %v1549
      %v1668 = vunpack.c.l.s4 1966171168
      %v1669 = vunpack.c.0.s8 %v1668
      %v1670 = vlaneseq
      %v1671 = vshrl.u32 %v1670, 7
      %v1672 = vsub.s32 %v1669, %v1671
      %v1673 = vrot.slane %v1666, %v1672
      %v1675 = vunpack.c.l.s4 1966171168
      %v1676 = vunpack.c.0.s8 %v1675
      %v1677 = vlaneseq
      %v1678 = vshrl.u32 %v1677, 7
      %v1679 = vsub.s32 %v1676, %v1678
      %v1680 = vrot.slane %v1673, %v1679
      %1682 = vst.msk [vmem:[#allocation2 + $0x6] sm:$0x1] %vm1553, %v1680
      %v1683 = vcombine.high %v1673, %v1673
      %v1685 = vunpack.c.l.s4 1966171168
      %v1686 = vunpack.c.0.s8 %v1685
      %v1687 = vlaneseq
      %v1688 = vshrl.u32 %v1687, 7
      %v1689 = vsub.s32 %v1686, %v1688
      %v1690 = vrot.slane %v1683, %v1689
      %1691 = vrot.lane.b32.xlu0 %v1690, 64
      %v1692 = vpop.permute.xlu0 %1691
      %1694 = vst.msk [vmem:[#allocation2 + $0x6] sm:$0x1] %vm1583, %v1692
      %v1695 = vcombine.high %v1680, %v1680
      %1697 = vst.msk [vmem:[#allocation2 + $0x7] sm:$0x1] %vm1553, %v1695
      %v1698 = vcombine.high %v1690, %v1690
      %1699 = vrot.lane.b32.xlu0 %v1698, 64
      %v1700 = vpop.permute.xlu0 %1699
      %1702 = vst.msk [vmem:[#allocation2 + $0x7] sm:$0x1] %vm1583, %v1700
      %v1703 = vld [vmem:[#allocation2] sm:$0xff]
      %v1705 = vlaneseq
      %v1706 = vshrl.u32 %v1705, 7
      %v1707 = vsub.s32 0, %v1706
      %v1708 = vrot.slane %v1703, %v1707
      %v1709 = vlaneseq
      %v1710 = vshrl.u32 %v1709, 7
      %v1711 = vsub.s32 1, %v1710
      %v1712 = vrot.slane %v1703, %v1711
      %v1713 = vlaneseq
      %v1714 = vshrl.u32 %v1713, 7
      %v1715 = vsub.s32 2, %v1714
      %v1716 = vrot.slane %v1703, %v1715
      %v1717 = vlaneseq
      %v1718 = vshrl.u32 %v1717, 7
      %v1719 = vsub.s32 3, %v1718
      %v1720 = vrot.slane %v1703, %v1719
      %v1721 = vlaneseq
      %v1722 = vshrl.u32 %v1721, 7
      %v1723 = vsub.s32 4, %v1722
      %v1724 = vrot.slane %v1703, %v1723
      %v1725 = vlaneseq
      %v1726 = vshrl.u32 %v1725, 7
      %v1727 = vsub.s32 5, %v1726
      %v1728 = vrot.slane %v1703, %v1727
      %v1729 = vlaneseq
      %v1730 = vshrl.u32 %v1729, 7
      %v1731 = vsub.s32 6, %v1730
      %v1732 = vrot.slane %v1703, %v1731
      %v1733 = vlaneseq
      %v1734 = vshrl.u32 %v1733, 7
      %v1735 = vsub.s32 7, %v1734
      %v1736 = vrot.slane %v1703, %v1735
      %v1745 = vpack.c.bf16 %v1708, %v1708
      %v1746 = vpack.c.bf16 %v1712, %v1712
      %v1747 = vpack.c.bf16 %v1716, %v1716
      %v1748 = vpack.c.bf16 %v1720, %v1720
      %v1749 = vpack.c.bf16 %v1724, %v1724
      %v1750 = vpack.c.bf16 %v1728, %v1728
      %v1751 = vpack.c.bf16 %v1732, %v1732
      %v1752 = vpack.c.bf16 %v1736, %v1736
      %v1753 = vld [vmem:[%s6] sm:$0xf]
      %v1754 = vld [vmem:[%s6 + $0x4] sm:$0xf]
      %v1755 = vld [vmem:[%s6 + $0x8] sm:$0xf]
      %v1756 = vld [vmem:[%s6 + $0xc] sm:$0xf]
      %v1757 = vld [vmem:[%s6 + $0x10] sm:$0xf]
      %v1758 = vld [vmem:[%s6 + $0x14] sm:$0xf]
      %v1759 = vld [vmem:[%s6 + $0x18] sm:$0xf]
      %v1760 = vld [vmem:[%s6 + $0x1c] sm:$0xf]
      %v1761 = vld [vmem:[%s6 + $0x20] sm:$0xf]
      %v1762 = vld [vmem:[%s6 + $0x24] sm:$0xf]
      %v1763 = vld [vmem:[%s6 + $0x28] sm:$0xf]
      %v1764 = vld [vmem:[%s6 + $0x2c] sm:$0xf]
      %v1765 = vld [vmem:[%s6 + $0x30] sm:$0xf]
      %v1766 = vld [vmem:[%s6 + $0x34] sm:$0xf]
      %v1767 = vld [vmem:[%s6 + $0x38] sm:$0xf]
      %v1768 = vld [vmem:[%s6 + $0x3c] sm:$0xf]
      %v1769 = vld [vmem:[%s6 + $0x40] sm:$0xf]
      %v1770 = vld [vmem:[%s6 + $0x44] sm:$0xf]
      %v1771 = vld [vmem:[%s6 + $0x48] sm:$0xf]
      %v1772 = vld [vmem:[%s6 + $0x4c] sm:$0xf]
      %v1773 = vld [vmem:[%s6 + $0x50] sm:$0xf]
      %v1774 = vld [vmem:[%s6 + $0x54] sm:$0xf]
      %v1775 = vld [vmem:[%s6 + $0x58] sm:$0xf]
      %v1776 = vld [vmem:[%s6 + $0x5c] sm:$0xf]
      %v1777 = vld [vmem:[%s6 + $0x60] sm:$0xf]
      %v1778 = vld [vmem:[%s6 + $0x64] sm:$0xf]
      %v1779 = vld [vmem:[%s6 + $0x68] sm:$0xf]
      %v1780 = vld [vmem:[%s6 + $0x6c] sm:$0xf]
      %v1781 = vld [vmem:[%s6 + $0x70] sm:$0xf]
      %v1782 = vld [vmem:[%s6 + $0x74] sm:$0xf]
      %v1783 = vld [vmem:[%s6 + $0x78] sm:$0xf]
      %v1784 = vld [vmem:[%s6 + $0x7c] sm:$0xf]
      %v1785 = vld [vmem:[%s6 + $0x80] sm:$0xf]
      %v1786 = vld [vmem:[%s6 + $0x84] sm:$0xf]
      %v1787 = vld [vmem:[%s6 + $0x88] sm:$0xf]
      %v1788 = vld [vmem:[%s6 + $0x8c] sm:$0xf]
      %v1789 = vld [vmem:[%s6 + $0x90] sm:$0xf]
      %v1790 = vld [vmem:[%s6 + $0x94] sm:$0xf]
      %v1791 = vld [vmem:[%s6 + $0x98] sm:$0xf]
      %v1792 = vld [vmem:[%s6 + $0x9c] sm:$0xf]
      %v1793 = vld [vmem:[%s6 + $0xa0] sm:$0xf]
      %v1794 = vld [vmem:[%s6 + $0xa4] sm:$0xf]
      %v1795 = vld [vmem:[%s6 + $0xa8] sm:$0xf]
      %v1796 = vld [vmem:[%s6 + $0xac] sm:$0xf]
      %v1797 = vld [vmem:[%s6 + $0xb0] sm:$0xf]
      %v1798 = vld [vmem:[%s6 + $0xb4] sm:$0xf]
      %v1799 = vld [vmem:[%s6 + $0xb8] sm:$0xf]
      %v1800 = vld [vmem:[%s6 + $0xbc] sm:$0xf]
      %v1801 = vld [vmem:[%s6 + $0xc0] sm:$0xf]
      %v1802 = vld [vmem:[%s6 + $0xc4] sm:$0xf]
      %v1803 = vld [vmem:[%s6 + $0xc8] sm:$0xf]
      %v1804 = vld [vmem:[%s6 + $0xcc] sm:$0xf]
      %v1805 = vld [vmem:[%s6 + $0xd0] sm:$0xf]
      %v1806 = vld [vmem:[%s6 + $0xd4] sm:$0xf]
      %v1807 = vld [vmem:[%s6 + $0xd8] sm:$0xf]
      %v1808 = vld [vmem:[%s6 + $0xdc] sm:$0xf]
      %v1809 = vld [vmem:[%s6 + $0xe0] sm:$0xf]
      %v1810 = vld [vmem:[%s6 + $0xe4] sm:$0xf]
      %v1811 = vld [vmem:[%s6 + $0xe8] sm:$0xf]
      %v1812 = vld [vmem:[%s6 + $0xec] sm:$0xf]
      %v1813 = vld [vmem:[%s6 + $0xf0] sm:$0xf]
      %v1814 = vld [vmem:[%s6 + $0xf4] sm:$0xf]
      %v1815 = vld [vmem:[%s6 + $0xf8] sm:$0xf]
      %v1816 = vld [vmem:[%s6 + $0xfc] sm:$0xf]
      %v1817 = vld [vmem:[%s6 + $0x100] sm:$0xf]
      %v1818 = vld [vmem:[%s6 + $0x104] sm:$0xf]
      %v1819 = vld [vmem:[%s6 + $0x108] sm:$0xf]
      %v1820 = vld [vmem:[%s6 + $0x10c] sm:$0xf]
      %v1821 = vld [vmem:[%s6 + $0x110] sm:$0xf]
      %v1822 = vld [vmem:[%s6 + $0x114] sm:$0xf]
      %v1823 = vld [vmem:[%s6 + $0x118] sm:$0xf]
      %v1824 = vld [vmem:[%s6 + $0x11c] sm:$0xf]
      %v1825 = vld [vmem:[%s6 + $0x120] sm:$0xf]
      %v1826 = vld [vmem:[%s6 + $0x124] sm:$0xf]
      %v1827 = vld [vmem:[%s6 + $0x128] sm:$0xf]
      %v1828 = vld [vmem:[%s6 + $0x12c] sm:$0xf]
      %v1829 = vld [vmem:[%s6 + $0x130] sm:$0xf]
      %v1830 = vld [vmem:[%s6 + $0x134] sm:$0xf]
      %v1831 = vld [vmem:[%s6 + $0x138] sm:$0xf]
      %v1832 = vld [vmem:[%s6 + $0x13c] sm:$0xf]
      %v1833 = vld [vmem:[%s6 + $0x140] sm:$0xf]
      %v1834 = vld [vmem:[%s6 + $0x144] sm:$0xf]
      %v1835 = vld [vmem:[%s6 + $0x148] sm:$0xf]
      %v1836 = vld [vmem:[%s6 + $0x14c] sm:$0xf]
      %v1837 = vld [vmem:[%s6 + $0x150] sm:$0xf]
      %v1838 = vld [vmem:[%s6 + $0x154] sm:$0xf]
      %v1839 = vld [vmem:[%s6 + $0x158] sm:$0xf]
      %v1840 = vld [vmem:[%s6 + $0x15c] sm:$0xf]
      %v1841 = vld [vmem:[%s6 + $0x160] sm:$0xf]
      %v1842 = vld [vmem:[%s6 + $0x164] sm:$0xf]
      %v1843 = vld [vmem:[%s6 + $0x168] sm:$0xf]
      %v1844 = vld [vmem:[%s6 + $0x16c] sm:$0xf]
      %v1845 = vld [vmem:[%s6 + $0x170] sm:$0xf]
      %v1846 = vld [vmem:[%s6 + $0x174] sm:$0xf]
      %v1847 = vld [vmem:[%s6 + $0x178] sm:$0xf]
      %v1848 = vld [vmem:[%s6 + $0x17c] sm:$0xf]
      %v1849 = vld [vmem:[%s6 + $0x180] sm:$0xf]
      %v1850 = vld [vmem:[%s6 + $0x184] sm:$0xf]
      %v1851 = vld [vmem:[%s6 + $0x188] sm:$0xf]
      %v1852 = vld [vmem:[%s6 + $0x18c] sm:$0xf]
      %v1853 = vld [vmem:[%s6 + $0x190] sm:$0xf]
      %v1854 = vld [vmem:[%s6 + $0x194] sm:$0xf]
      %v1855 = vld [vmem:[%s6 + $0x198] sm:$0xf]
      %v1856 = vld [vmem:[%s6 + $0x19c] sm:$0xf]
      %v1857 = vld [vmem:[%s6 + $0x1a0] sm:$0xf]
      %v1858 = vld [vmem:[%s6 + $0x1a4] sm:$0xf]
      %v1859 = vld [vmem:[%s6 + $0x1a8] sm:$0xf]
      %v1860 = vld [vmem:[%s6 + $0x1ac] sm:$0xf]
      %v1861 = vld [vmem:[%s6 + $0x1b0] sm:$0xf]
      %v1862 = vld [vmem:[%s6 + $0x1b4] sm:$0xf]
      %v1863 = vld [vmem:[%s6 + $0x1b8] sm:$0xf]
      %v1864 = vld [vmem:[%s6 + $0x1bc] sm:$0xf]
      %v1865 = vld [vmem:[%s6 + $0x1c0] sm:$0xf]
      %v1866 = vld [vmem:[%s6 + $0x1c4] sm:$0xf]
      %v1867 = vld [vmem:[%s6 + $0x1c8] sm:$0xf]
      %v1868 = vld [vmem:[%s6 + $0x1cc] sm:$0xf]
      %v1869 = vld [vmem:[%s6 + $0x1d0] sm:$0xf]
      %v1870 = vld [vmem:[%s6 + $0x1d4] sm:$0xf]
      %v1871 = vld [vmem:[%s6 + $0x1d8] sm:$0xf]
      %v1872 = vld [vmem:[%s6 + $0x1dc] sm:$0xf]
      %v1873 = vld [vmem:[%s6 + $0x1e0] sm:$0xf]
      %v1874 = vld [vmem:[%s6 + $0x1e4] sm:$0xf]
      %v1875 = vld [vmem:[%s6 + $0x1e8] sm:$0xf]
      %v1876 = vld [vmem:[%s6 + $0x1ec] sm:$0xf]
      %v1877 = vld [vmem:[%s6 + $0x1f0] sm:$0xf]
      %v1878 = vld [vmem:[%s6 + $0x1f4] sm:$0xf]
      %v1879 = vld [vmem:[%s6 + $0x1f8] sm:$0xf]
      %v1880 = vld [vmem:[%s6 + $0x1fc] sm:$0xf]
      %v1881 = vld [vmem:[%s7] sm:$0x1]
      %v2010 = vunpack.c.l.b16 %v1753
      %v2011 = vunpack.c.l.b16 %v1754
      %v2012 = vunpack.c.l.b16 %v1755
      %v2013 = vunpack.c.l.b16 %v1756
      %v2014 = vunpack.c.l.b16 %v1757
      %v2015 = vunpack.c.l.b16 %v1758
      %v2016 = vunpack.c.l.b16 %v1759
      %v2017 = vunpack.c.l.b16 %v1760
      %v2018 = vunpack.c.l.b16 %v1761
      %v2019 = vunpack.c.l.b16 %v1762
      %v2020 = vunpack.c.l.b16 %v1763
      %v2021 = vunpack.c.l.b16 %v1764
      %v2022 = vunpack.c.l.b16 %v1765
      %v2023 = vunpack.c.l.b16 %v1766
      %v2024 = vunpack.c.l.b16 %v1767
      %v2025 = vunpack.c.l.b16 %v1768
      %v2026 = vunpack.c.l.b16 %v1769
      %v2027 = vunpack.c.l.b16 %v1770
      %v2028 = vunpack.c.l.b16 %v1771
      %v2029 = vunpack.c.l.b16 %v1772
      %v2030 = vunpack.c.l.b16 %v1773
      %v2031 = vunpack.c.l.b16 %v1774
      %v2032 = vunpack.c.l.b16 %v1775
      %v2033 = vunpack.c.l.b16 %v1776
      %v2034 = vunpack.c.l.b16 %v1777
      %v2035 = vunpack.c.l.b16 %v1778
      %v2036 = vunpack.c.l.b16 %v1779
      %v2037 = vunpack.c.l.b16 %v1780
      %v2038 = vunpack.c.l.b16 %v1781
      %v2039 = vunpack.c.l.b16 %v1782
      %v2040 = vunpack.c.l.b16 %v1783
      %v2041 = vunpack.c.l.b16 %v1784
      %v2042 = vunpack.c.l.b16 %v1785
      %v2043 = vunpack.c.l.b16 %v1786
      %v2044 = vunpack.c.l.b16 %v1787
      %v2045 = vunpack.c.l.b16 %v1788
      %v2046 = vunpack.c.l.b16 %v1789
      %v2047 = vunpack.c.l.b16 %v1790
      %v2048 = vunpack.c.l.b16 %v1791
      %v2049 = vunpack.c.l.b16 %v1792
      %v2050 = vunpack.c.l.b16 %v1793
      %v2051 = vunpack.c.l.b16 %v1794
      %v2052 = vunpack.c.l.b16 %v1795
      %v2053 = vunpack.c.l.b16 %v1796
      %v2054 = vunpack.c.l.b16 %v1797
      %v2055 = vunpack.c.l.b16 %v1798
      %v2056 = vunpack.c.l.b16 %v1799
      %v2057 = vunpack.c.l.b16 %v1800
      %v2058 = vunpack.c.l.b16 %v1801
      %v2059 = vunpack.c.l.b16 %v1802
      %v2060 = vunpack.c.l.b16 %v1803
      %v2061 = vunpack.c.l.b16 %v1804
      %v2062 = vunpack.c.l.b16 %v1805
      %v2063 = vunpack.c.l.b16 %v1806
      %v2064 = vunpack.c.l.b16 %v1807
      %v2065 = vunpack.c.l.b16 %v1808
      %v2066 = vunpack.c.l.b16 %v1809
      %v2067 = vunpack.c.l.b16 %v1810
      %v2068 = vunpack.c.l.b16 %v1811
      %v2069 = vunpack.c.l.b16 %v1812
      %v2070 = vunpack.c.l.b16 %v1813
      %v2071 = vunpack.c.l.b16 %v1814
      %v2072 = vunpack.c.l.b16 %v1815
      %v2073 = vunpack.c.l.b16 %v1816
      %v2074 = vunpack.c.l.b16 %v1817
      %v2075 = vunpack.c.l.b16 %v1818
      %v2076 = vunpack.c.l.b16 %v1819
      %v2077 = vunpack.c.l.b16 %v1820
      %v2078 = vunpack.c.l.b16 %v1821
      %v2079 = vunpack.c.l.b16 %v1822
      %v2080 = vunpack.c.l.b16 %v1823
      %v2081 = vunpack.c.l.b16 %v1824
      %v2082 = vunpack.c.l.b16 %v1825
      %v2083 = vunpack.c.l.b16 %v1826
      %v2084 = vunpack.c.l.b16 %v1827
      %v2085 = vunpack.c.l.b16 %v1828
      %v2086 = vunpack.c.l.b16 %v1829
      %v2087 = vunpack.c.l.b16 %v1830
      %v2088 = vunpack.c.l.b16 %v1831
      %v2089 = vunpack.c.l.b16 %v1832
      %v2090 = vunpack.c.l.b16 %v1833
      %v2091 = vunpack.c.l.b16 %v1834
      %v2092 = vunpack.c.l.b16 %v1835
      %v2093 = vunpack.c.l.b16 %v1836
      %v2094 = vunpack.c.l.b16 %v1837
      %v2095 = vunpack.c.l.b16 %v1838
      %v2096 = vunpack.c.l.b16 %v1839
      %v2097 = vunpack.c.l.b16 %v1840
      %v2098 = vunpack.c.l.b16 %v1841
      %v2099 = vunpack.c.l.b16 %v1842
      %v2100 = vunpack.c.l.b16 %v1843
      %v2101 = vunpack.c.l.b16 %v1844
      %v2102 = vunpack.c.l.b16 %v1845
      %v2103 = vunpack.c.l.b16 %v1846
      %v2104 = vunpack.c.l.b16 %v1847
      %v2105 = vunpack.c.l.b16 %v1848
      %v2106 = vunpack.c.l.b16 %v1849
      %v2107 = vunpack.c.l.b16 %v1850
      %v2108 = vunpack.c.l.b16 %v1851
      %v2109 = vunpack.c.l.b16 %v1852
      %v2110 = vunpack.c.l.b16 %v1853
      %v2111 = vunpack.c.l.b16 %v1854
      %v2112 = vunpack.c.l.b16 %v1855
      %v2113 = vunpack.c.l.b16 %v1856
      %v2114 = vunpack.c.l.b16 %v1857
      %v2115 = vunpack.c.l.b16 %v1858
      %v2116 = vunpack.c.l.b16 %v1859
      %v2117 = vunpack.c.l.b16 %v1860
      %v2118 = vunpack.c.l.b16 %v1861
      %v2119 = vunpack.c.l.b16 %v1862
      %v2120 = vunpack.c.l.b16 %v1863
      %v2121 = vunpack.c.l.b16 %v1864
      %v2122 = vunpack.c.l.b16 %v1865
      %v2123 = vunpack.c.l.b16 %v1866
      %v2124 = vunpack.c.l.b16 %v1867
      %v2125 = vunpack.c.l.b16 %v1868
      %v2126 = vunpack.c.l.b16 %v1869
      %v2127 = vunpack.c.l.b16 %v1870
      %v2128 = vunpack.c.l.b16 %v1871
      %v2129 = vunpack.c.l.b16 %v1872
      %v2130 = vunpack.c.l.b16 %v1873
      %v2131 = vunpack.c.l.b16 %v1874
      %v2132 = vunpack.c.l.b16 %v1875
      %v2133 = vunpack.c.l.b16 %v1876
      %v2134 = vunpack.c.l.b16 %v1877
      %v2135 = vunpack.c.l.b16 %v1878
      %v2136 = vunpack.c.l.b16 %v1879
      %v2137 = vunpack.c.l.b16 %v1880
      %v2138 = vpack.c.b16 %v2011, %v2010
      %v2139 = vpack.c.b16 %v2013, %v2012
      %v2140 = vpack.c.b16 %v2015, %v2014
      %v2141 = vpack.c.b16 %v2017, %v2016
      %v2142 = vpack.c.b16 %v2019, %v2018
      %v2143 = vpack.c.b16 %v2021, %v2020
      %v2144 = vpack.c.b16 %v2023, %v2022
      %v2145 = vpack.c.b16 %v2025, %v2024
      %v2146 = vpack.c.b16 %v2027, %v2026
      %v2147 = vpack.c.b16 %v2029, %v2028
      %v2148 = vpack.c.b16 %v2031, %v2030
      %v2149 = vpack.c.b16 %v2033, %v2032
      %v2150 = vpack.c.b16 %v2035, %v2034
      %v2151 = vpack.c.b16 %v2037, %v2036
      %v2152 = vpack.c.b16 %v2039, %v2038
      %v2153 = vpack.c.b16 %v2041, %v2040
      %v2154 = vpack.c.b16 %v2043, %v2042
      %v2155 = vpack.c.b16 %v2045, %v2044
      %v2156 = vpack.c.b16 %v2047, %v2046
      %v2157 = vpack.c.b16 %v2049, %v2048
      %v2158 = vpack.c.b16 %v2051, %v2050
      %v2159 = vpack.c.b16 %v2053, %v2052
      %v2160 = vpack.c.b16 %v2055, %v2054
      %v2161 = vpack.c.b16 %v2057, %v2056
      %v2162 = vpack.c.b16 %v2059, %v2058
      %v2163 = vpack.c.b16 %v2061, %v2060
      %v2164 = vpack.c.b16 %v2063, %v2062
      %v2165 = vpack.c.b16 %v2065, %v2064
      %v2166 = vpack.c.b16 %v2067, %v2066
      %v2167 = vpack.c.b16 %v2069, %v2068
      %v2168 = vpack.c.b16 %v2071, %v2070
      %v2169 = vpack.c.b16 %v2073, %v2072
      %v2170 = vpack.c.b16 %v2075, %v2074
      %v2171 = vpack.c.b16 %v2077, %v2076
      %v2172 = vpack.c.b16 %v2079, %v2078
      %v2173 = vpack.c.b16 %v2081, %v2080
      %v2174 = vpack.c.b16 %v2083, %v2082
      %v2175 = vpack.c.b16 %v2085, %v2084
      %v2176 = vpack.c.b16 %v2087, %v2086
      %v2177 = vpack.c.b16 %v2089, %v2088
      %v2178 = vpack.c.b16 %v2091, %v2090
      %v2179 = vpack.c.b16 %v2093, %v2092
      %v2180 = vpack.c.b16 %v2095, %v2094
      %v2181 = vpack.c.b16 %v2097, %v2096
      %v2182 = vpack.c.b16 %v2099, %v2098
      %v2183 = vpack.c.b16 %v2101, %v2100
      %v2184 = vpack.c.b16 %v2103, %v2102
      %v2185 = vpack.c.b16 %v2105, %v2104
      %v2186 = vpack.c.b16 %v2107, %v2106
      %v2187 = vpack.c.b16 %v2109, %v2108
      %v2188 = vpack.c.b16 %v2111, %v2110
      %v2189 = vpack.c.b16 %v2113, %v2112
      %v2190 = vpack.c.b16 %v2115, %v2114
      %v2191 = vpack.c.b16 %v2117, %v2116
      %v2192 = vpack.c.b16 %v2119, %v2118
      %v2193 = vpack.c.b16 %v2121, %v2120
      %v2194 = vpack.c.b16 %v2123, %v2122
      %v2195 = vpack.c.b16 %v2125, %v2124
      %v2196 = vpack.c.b16 %v2127, %v2126
      %v2197 = vpack.c.b16 %v2129, %v2128
      %v2198 = vpack.c.b16 %v2131, %v2130
      %v2199 = vpack.c.b16 %v2133, %v2132
      %v2200 = vpack.c.b16 %v2135, %v2134
      %v2201 = vpack.c.b16 %v2137, %v2136
      %2266 = vmatprep.subr.bf16.mxu0 0
      %2267 = vmatpush1.bf16.msra.mxu0 %v2138
      %2268 = vmatprep.subr.bf16.mxu0 0
      %2269 = vmatpush1.bf16.msra.mxu0 %v2139
      %2270 = vmatprep.subr.bf16.mxu0 0
      %2271 = vmatpush1.bf16.msra.mxu0 %v2140
      %2272 = vmatprep.subr.bf16.mxu0 0
      %2273 = vmatpush1.bf16.msra.mxu0 %v2141
      %2274 = vmatprep.subr.bf16.mxu0 0
      %2275 = vmatpush1.bf16.msra.mxu0 %v2142
      %2276 = vmatprep.subr.bf16.mxu0 0
      %2277 = vmatpush1.bf16.msra.mxu0 %v2143
      %2278 = vmatprep.subr.bf16.mxu0 0
      %2279 = vmatpush1.bf16.msra.mxu0 %v2144
      %2280 = vmatprep.subr.bf16.mxu0 0
      %2281 = vmatpush1.bf16.msra.mxu0 %v2145
      %2282 = vmatprep.subr.bf16.mxu0 0
      %2283 = vmatpush1.bf16.msra.mxu0 %v2146
      %2284 = vmatprep.subr.bf16.mxu0 0
      %2285 = vmatpush1.bf16.msra.mxu0 %v2147
      %2286 = vmatprep.subr.bf16.mxu0 0
      %2287 = vmatpush1.bf16.msra.mxu0 %v2148
      %2288 = vmatprep.subr.bf16.mxu0 0
      %2289 = vmatpush1.bf16.msra.mxu0 %v2149
      %2290 = vmatprep.subr.bf16.mxu0 0
      %2291 = vmatpush1.bf16.msra.mxu0 %v2150
      %2292 = vmatprep.subr.bf16.mxu0 0
      %2293 = vmatpush1.bf16.msra.mxu0 %v2151
      %2294 = vmatprep.subr.bf16.mxu0 0
      %2295 = vmatpush1.bf16.msra.mxu0 %v2152
      %2296 = vmatprep.subr.bf16.mxu0 0
      %2297 = vmatpush1.bf16.msra.mxu0 %v2153
      %2298 = vmatprep.mubr.bf16.mxu0 %v1746
      %2299 = vmatmul.mubr.bf16.gmra.mrb[0].mxu0 %v1745
      %v2300 = vpop.f32.mrb[0].mxu0
      %v2301 = vadd.f32 %v1881, %v2300
      %v2302 = vpop.f32.mrb[0].mxu0
      %v2303 = vpop.f32.mrb[0].mxu0
      %v2304 = vpop.f32.mrb[0].mxu0
      %2305 = vdwg.mxu0
      %2306 = vmatprep.subr.bf16.mxu0 0
      %2307 = vmatpush1.bf16.msra.mxu0 %v2154
      %2308 = vmatprep.subr.bf16.mxu0 0
      %2309 = vmatpush1.bf16.msra.mxu0 %v2155
      %2310 = vmatprep.subr.bf16.mxu0 0
      %2311 = vmatpush1.bf16.msra.mxu0 %v2156
      %2312 = vmatprep.subr.bf16.mxu0 0
      %2313 = vmatpush1.bf16.msra.mxu0 %v2157
      %2314 = vmatprep.subr.bf16.mxu0 0
      %2315 = vmatpush1.bf16.msra.mxu0 %v2158
      %2316 = vmatprep.subr.bf16.mxu0 0
      %2317 = vmatpush1.bf16.msra.mxu0 %v2159
      %2318 = vmatprep.subr.bf16.mxu0 0
      %2319 = vmatpush1.bf16.msra.mxu0 %v2160
      %2320 = vmatprep.subr.bf16.mxu0 0
      %2321 = vmatpush1.bf16.msra.mxu0 %v2161
      %2322 = vmatprep.subr.bf16.mxu0 0
      %2323 = vmatpush1.bf16.msra.mxu0 %v2162
      %2324 = vmatprep.subr.bf16.mxu0 0
      %2325 = vmatpush1.bf16.msra.mxu0 %v2163
      %2326 = vmatprep.subr.bf16.mxu0 0
      %2327 = vmatpush1.bf16.msra.mxu0 %v2164
      %2328 = vmatprep.subr.bf16.mxu0 0
      %2329 = vmatpush1.bf16.msra.mxu0 %v2165
      %2330 = vmatprep.subr.bf16.mxu0 0
      %2331 = vmatpush1.bf16.msra.mxu0 %v2166
      %2332 = vmatprep.subr.bf16.mxu0 0
      %2333 = vmatpush1.bf16.msra.mxu0 %v2167
      %2334 = vmatprep.subr.bf16.mxu0 0
      %2335 = vmatpush1.bf16.msra.mxu0 %v2168
      %2336 = vmatprep.subr.bf16.mxu0 0
      %2337 = vmatpush1.bf16.msra.mxu0 %v2169
      %2338 = vmatprep.mubr.bf16.mxu0 %v1748
      %2339 = vmatmul.mubr.bf16.gmra.mrb[0].mxu0 %v1747
      %v2340 = vpop.f32.mrb[0].mxu0
      %v2341 = vadd.f32 %v2301, %v2340
      %v2342 = vpop.f32.mrb[0].mxu0
      %v2343 = vpop.f32.mrb[0].mxu0
      %v2344 = vpop.f32.mrb[0].mxu0
      %2345 = vdwg.mxu0
      %2346 = vmatprep.subr.bf16.mxu0 0
      %2347 = vmatpush1.bf16.msra.mxu0 %v2170
      %2348 = vmatprep.subr.bf16.mxu0 0
      %2349 = vmatpush1.bf16.msra.mxu0 %v2171
      %2350 = vmatprep.subr.bf16.mxu0 0
      %2351 = vmatpush1.bf16.msra.mxu0 %v2172
      %2352 = vmatprep.subr.bf16.mxu0 0
      %2353 = vmatpush1.bf16.msra.mxu0 %v2173
      %2354 = vmatprep.subr.bf16.mxu0 0
      %2355 = vmatpush1.bf16.msra.mxu0 %v2174
      %2356 = vmatprep.subr.bf16.mxu0 0
      %2357 = vmatpush1.bf16.msra.mxu0 %v2175
      %2358 = vmatprep.subr.bf16.mxu0 0
      %2359 = vmatpush1.bf16.msra.mxu0 %v2176
      %2360 = vmatprep.subr.bf16.mxu0 0
      %2361 = vmatpush1.bf16.msra.mxu0 %v2177
      %2362 = vmatprep.subr.bf16.mxu0 0
      %2363 = vmatpush1.bf16.msra.mxu0 %v2178
      %2364 = vmatprep.subr.bf16.mxu0 0
      %2365 = vmatpush1.bf16.msra.mxu0 %v2179
      %2366 = vmatprep.subr.bf16.mxu0 0
      %2367 = vmatpush1.bf16.msra.mxu0 %v2180
      %2368 = vmatprep.subr.bf16.mxu0 0
      %2369 = vmatpush1.bf16.msra.mxu0 %v2181
      %2370 = vmatprep.subr.bf16.mxu0 0
      %2371 = vmatpush1.bf16.msra.mxu0 %v2182
      %2372 = vmatprep.subr.bf16.mxu0 0
      %2373 = vmatpush1.bf16.msra.mxu0 %v2183
      %2374 = vmatprep.subr.bf16.mxu0 0
      %2375 = vmatpush1.bf16.msra.mxu0 %v2184
      %2376 = vmatprep.subr.bf16.mxu0 0
      %2377 = vmatpush1.bf16.msra.mxu0 %v2185
      %2378 = vmatprep.mubr.bf16.mxu0 %v1750
      %2379 = vmatmul.mubr.bf16.gmra.mrb[0].mxu0 %v1749
      %v2380 = vpop.f32.mrb[0].mxu0
      %v2381 = vadd.f32 %v2341, %v2380
      %v2382 = vpop.f32.mrb[0].mxu0
      %v2383 = vpop.f32.mrb[0].mxu0
      %v2384 = vpop.f32.mrb[0].mxu0
      %2385 = vdwg.mxu0
      %2386 = vmatprep.subr.bf16.mxu0 0
      %2387 = vmatpush1.bf16.msra.mxu0 %v2186
      %2388 = vmatprep.subr.bf16.mxu0 0
      %2389 = vmatpush1.bf16.msra.mxu0 %v2187
      %2390 = vmatprep.subr.bf16.mxu0 0
      %2391 = vmatpush1.bf16.msra.mxu0 %v2188
      %2392 = vmatprep.subr.bf16.mxu0 0
      %2393 = vmatpush1.bf16.msra.mxu0 %v2189
      %2394 = vmatprep.subr.bf16.mxu0 0
      %2395 = vmatpush1.bf16.msra.mxu0 %v2190
      %2396 = vmatprep.subr.bf16.mxu0 0
      %2397 = vmatpush1.bf16.msra.mxu0 %v2191
      %2398 = vmatprep.subr.bf16.mxu0 0
      %2399 = vmatpush1.bf16.msra.mxu0 %v2192
      %2400 = vmatprep.subr.bf16.mxu0 0
      %2401 = vmatpush1.bf16.msra.mxu0 %v2193
      %2402 = vmatprep.subr.bf16.mxu0 0
      %2403 = vmatpush1.bf16.msra.mxu0 %v2194
      %2404 = vmatprep.subr.bf16.mxu0 0
      %2405 = vmatpush1.bf16.msra.mxu0 %v2195
      %2406 = vmatprep.subr.bf16.mxu0 0
      %2407 = vmatpush1.bf16.msra.mxu0 %v2196
      %2408 = vmatprep.subr.bf16.mxu0 0
      %2409 = vmatpush1.bf16.msra.mxu0 %v2197
      %2410 = vmatprep.subr.bf16.mxu0 0
      %2411 = vmatpush1.bf16.msra.mxu0 %v2198
      %2412 = vmatprep.subr.bf16.mxu0 0
      %2413 = vmatpush1.bf16.msra.mxu0 %v2199
      %2414 = vmatprep.subr.bf16.mxu0 0
      %2415 = vmatpush1.bf16.msra.mxu0 %v2200
      %2416 = vmatprep.subr.bf16.mxu0 0
      %2417 = vmatpush1.bf16.msra.mxu0 %v2201
      %2418 = vmatprep.mubr.bf16.mxu0 %v1752
      %2419 = vmatmul.mubr.bf16.gmra.mrb[0].mxu0 %v1751
      %v2420 = vpop.f32.mrb[0].mxu0
      %v2421 = vadd.f32 %v2381, %v2420
      %v2422 = vpop.f32.mrb[0].mxu0
      %v2423 = vpop.f32.mrb[0].mxu0
      %v2424 = vpop.f32.mrb[0].mxu0
      %2425 = vdwg.mxu0
      %v2426 = vmax.f32 %v2421, 0.0
      %v2427 = vld [vmem:[%s8] sm:$0x1]
      %v2428 = vmul.f32 %v2426, %v2427
      %vm2429 = vcmask 516096
      %v2430 = vsel %vm2429, %v2428, 0.0
      %2431 = vadd.xlane.f32.xlu0 %v2430
      %v2432 = vpop.xlane.xlu0 %2431
      %v2433 = vld [vmem:[#allocation3] sm:$0x1]
      %v2434 = vadd.f32 %v2432, %v2433
      %vm2435 = vcmask 0
      %2436 = vst.msk [vmem:[%s357] sm:$0x1] %vm2435, %v2434
      %p2437 = scmp.lt.s32.totalorder %s23, 1
      %s2438 = scalar_select %p2437, %s23, 1
      %s2439 = scalar_lea.vmem %s10, %s2438
      // Predicated region
      $region61: #{cifar10net_forward.1} parent=59 // pred_check
        %p2440 = pneg %p256
      $region62: #{cifar10net_forward.1} parent=59 // pred_check_branch
        %2442 = sbr.rel (%p2440) target = $region64
      $region63: #{cifar10net_forward.1} parent=59 // pred_region
        _
      $region64: #{cifar10net_forward.1} parent=59 // pred_fallthru
        _
    $region60: #{cifar10net_forward.1} parent=5 // pred_fallthru
      _
    %p2443 = scmp.le.s32.totalorder 2, %s18
    // Predicated region
    $region65: #{cifar10net_forward.1} parent=5 // pred_check
      %p2444 = pneg %p2443
    $region66: #{cifar10net_forward.1} parent=5 // pred_check_branch
      %2446 = sbr.rel (%p2444) target = $region68
    $region67: #{cifar10net_forward.1} parent=5 // pred_region
      %s2447 = ssub.s32 %s18, 2
      // Predicated region
      $region69: #{cifar10net_forward.1} parent=67 // pred_check
        %p2448 = pneg %p262
      $region70: #{cifar10net_forward.1} parent=67 // pred_check_branch
        %2450 = sbr.rel (%p2448) target = $region72
      $region71: #{cifar10net_forward.1} parent=67 // pred_region
        %p2451 = scmp.lt.s32.totalorder %s24, 1
        %s2452 = scalar_select %p2451, %s24, 1
        %s2453 = scalar_lea.vmem %s10, %s2452
      $region72: #{cifar10net_forward.1} parent=67 // pred_fallthru
        _
    $region68: #{cifar10net_forward.1} parent=5 // pred_fallthru
      _
  $region6: #{cifar10net_forward.1} parent=0 // loop_footer
    %s22 = sadd.s32 1, %s18
  $region7: #{cifar10net_forward.1} parent=0 // loop_footer_branch
    %17 = sbr.rel target = $region3
  $region8: #{cifar10net_forward.1} parent=0 // loop_exit
    _

</llo_original>
